<compile_context>
chip_gen: v7x
topology: tpu7x:2x2x1
jax: 0.10.0
libtpu: 0.0.40
codegen_flags: <defaults>
</compile_context>

<pallas_src>
import functools

import jax
import jax.numpy as jnp
from jax.experimental import pallas as pl
from jax.experimental.pallas import tpu as pltpu

H1, H2, H3, OUT = 256, 128, 32, 2
GATE3 = 128                     # layer-3 gate block padded to one full lane group
OUT_PAD = 8                     # logits padded to 8 lanes (full last dim of output)
VMEM_LIMIT_BYTES = 48 * 1024 * 1024   # safe on v5e/v6e (128 MiB) and v7x (64 MiB)


def _round_up(n, m):
    return (n + m - 1) // m * m


def _sigmoid_via_tanh(z):
    # sigmoid(z) == 0.5 * (tanh(0.5 * z) + 1): one EUP op per element.
    return 0.5 * jnp.tanh(0.5 * z) + 0.5


def _lstm_cell_step(x_bf16, w_ref, b_ref, gate_w):
    """One zero-state LSTM step. Weights packed as [i, g, o] with each gate in a
    gate_w-wide lane-aligned block: w (in, 3*gate_w) bf16, b (1, 3*gate_w) f32.
    Returns h (B, gate_w) f32 (padded lanes, if any, are exactly zero)."""
    z = jnp.dot(x_bf16, w_ref[...], preferred_element_type=jnp.float32) + b_ref[...]
    zi = z[:, 0 * gate_w:1 * gate_w]
    zg = z[:, 1 * gate_w:2 * gate_w]
    zo = z[:, 2 * gate_w:3 * gate_w]
    i = _sigmoid_via_tanh(zi)
    g = jnp.tanh(zg)
    o = _sigmoid_via_tanh(zo)
    c = i * g
    return o * jnp.tanh(c)


def lstm_classifier_kernel(x_ref,
                           w1_ref, b1_ref,
                           w2_ref, b2_ref,
                           w3_ref, b3_ref,
                           wf_ref, bf_ref,
                           out_ref):
    x = x_ref[...].astype(jnp.bfloat16)                                    # (TB, C)
    h1 = _lstm_cell_step(x, w1_ref, b1_ref, H1)                            # (TB, 256)
    # dropout1: identity at inference
    h2 = _lstm_cell_step(h1.astype(jnp.bfloat16), w2_ref, b2_ref, H2)      # (TB, 128)
    # dropout2: identity at inference
    h3 = _lstm_cell_step(h2.astype(jnp.bfloat16), w3_ref, b3_ref, GATE3)   # (TB, 128), lanes 32: are 0
    # hidden2label (padded to 8 output lanes; first 2 are real)
    out_ref[...] = (jnp.dot(h3.astype(jnp.bfloat16), wf_ref[...],
                            preferred_element_type=jnp.float32)
                    + bf_ref[...])                                         # (TB, 8)


def make_params(key, class_num):
    """Deterministic init mimicking PyTorch's U(-1/sqrt(H), 1/sqrt(H)), in the
    original PyTorch layout: w_ih (4H, in), biases (4H,) (b_ih+b_hh summed),
    fc (OUT, H3)."""
    def uni(k, shape, hidden):
        bound = 1.0 / jnp.sqrt(jnp.float32(hidden))
        return jax.random.uniform(k, shape, jnp.float32, -bound, bound)

    ks = jax.random.split(key, 11)
    params = {}
    params["w_ih1"] = uni(ks[0], (4 * H1, class_num), H1)
    params["b1"] = uni(ks[1], (4 * H1,), H1) + uni(ks[2], (4 * H1,), H1)   # b_ih + b_hh
    params["w_ih2"] = uni(ks[3], (4 * H2, H1), H2)
    params["b2"] = uni(ks[4], (4 * H2,), H2) + uni(ks[5], (4 * H2,), H2)
    params["w_ih3"] = uni(ks[6], (4 * H3, H2), H3)
    params["b3"] = uni(ks[7], (4 * H3,), H3) + uni(ks[8], (4 * H3,), H3)
    params["w_fc"] = uni(ks[9], (OUT, H3), H3)
    params["b_fc"] = uni(ks[10], (OUT,), H3)
    return params


def prepare_params(params):
    """One-time prep (hoisted out of the forward path): transpose, drop the
    forget gate ([i,f,g,o] -> [i,g,o]), place each gate in its own lane-aligned
    block (layer 3 gates padded 32 -> 128 lanes), pad the fc head to 8 output
    lanes, cast weights to bf16 (biases stay f32)."""
    def pack(w_ih, b, hidden, gate_w=None):
        gate_w = gate_w or hidden
        wt = w_ih.T                                                   # (in, 4H)

        def gate(idx):
            wg = wt[:, idx * hidden:(idx + 1) * hidden]
            bg = b[idx * hidden:(idx + 1) * hidden]
            if gate_w > hidden:
                wg = jnp.pad(wg, ((0, 0), (0, gate_w - hidden)))
                bg = jnp.pad(bg, (0, gate_w - hidden))
            return wg, bg

        wi, bi = gate(0)        # input gate
        wg_, bg_ = gate(2)      # cell gate
        wo, bo = gate(3)        # output gate
        w_p = jnp.concatenate([wi, wg_, wo], axis=1)                  # (in, 3*gate_w)
        b_p = jnp.concatenate([bi, bg_, bo])
        return w_p.astype(jnp.bfloat16), b_p.reshape(1, -1).astype(jnp.float32)

    w1, b1 = pack(params["w_ih1"], params["b1"], H1)                  # (C,   768)
    w2, b2 = pack(params["w_ih2"], params["b2"], H2)                  # (256, 384)
    w3, b3 = pack(params["w_ih3"], params["b3"], H3, gate_w=GATE3)    # (128, 384)
    # fc head: (H3, OUT) -> (GATE3, OUT_PAD); rows 32: and cols 2: are zero.
    wf = jnp.pad(params["w_fc"].T, ((0, GATE3 - H3), (0, OUT_PAD - OUT)))
    wf = wf.astype(jnp.bfloat16)
    bf = jnp.pad(params["b_fc"], (0, OUT_PAD - OUT)).reshape(1, -1).astype(jnp.float32)
    return (w1, b1, w2, b2, w3, b3, wf, bf)


def _choose_tiling(batch, max_tb, min_tiles):
    """Pick (tb, b_pad, n_tiles): tb multiple of 8, at most ~max_tb, aiming for
    at least min_tiles grid steps, with <8 rows of padding waste per tile."""
    n_tiles = max(min_tiles, pl.cdiv(_round_up(batch, 8), max_tb))
    tb = _round_up(pl.cdiv(batch, n_tiles), 8)
    b_pad = _round_up(batch, tb)
    return tb, b_pad, b_pad // tb


@functools.partial(jax.jit, static_argnames=("max_tb", "min_tiles"))
def lstm_classifier_forward(x, prepped, *, max_tb=2048, min_tiles=2):
    """x: (B, class_num) float32 -> logits (B, 2) float32."""
    B, C = x.shape
    w1, b1, w2, b2, w3, b3, wf, bf = prepped

    tb, b_pad, n_tiles = _choose_tiling(B, max_tb, min_tiles)
    if b_pad != B:
        x = jnp.pad(x, ((0, b_pad - B), (0, 0)))

    resident = lambda shape: pl.BlockSpec(shape, lambda i: (0, 0))

    # Advisory cost estimate for the XLA scheduler.
    flops = 2 * b_pad * (C * 3 * H1 + H1 * 3 * H2 + H2 * 3 * GATE3 + GATE3 * OUT_PAD)
    transcendentals = b_pad * 4 * (H1 + H2 + GATE3)
    weight_bytes = 2 * (C * 3 * H1 + H1 * 3 * H2 + H2 * 3 * GATE3 + GATE3 * OUT_PAD)
    bias_bytes = 4 * (3 * H1 + 3 * H2 + 3 * GATE3 + OUT_PAD)
    bytes_accessed = 4 * b_pad * C + 4 * b_pad * OUT_PAD + weight_bytes + bias_bytes

    out = pl.pallas_call(
        lstm_classifier_kernel,
        out_shape=jax.ShapeDtypeStruct((b_pad, OUT_PAD), jnp.float32),
        grid=(n_tiles,),
        in_specs=[
            pl.BlockSpec((tb, C), lambda i: (i, 0)),       # x: tiled over batch
            resident((C, 3 * H1)), resident((1, 3 * H1)),
            resident((H1, 3 * H2)), resident((1, 3 * H2)),
            resident((H2, 3 * GATE3)), resident((1, 3 * GATE3)),
            resident((GATE3, OUT_PAD)), resident((1, OUT_PAD)),
        ],
        out_specs=pl.BlockSpec((tb, OUT_PAD), lambda i: (i, 0)),
        compiler_params=pltpu.CompilerParams(
            dimension_semantics=("parallel",),
            vmem_limit_bytes=VMEM_LIMIT_BYTES),
        cost_estimate=pl.CostEstimate(
            flops=flops, transcendentals=transcendentals,
            bytes_accessed=bytes_accessed),
    )(x, w1, b1, w2, b2, w3, b3, wf, bf)

    return out[:B, :OUT]


def _reference_forward(x, params):
    """Pure-JAX reference on the original (PyTorch-layout) params, with the same
    bf16 rounding of matmul operands the kernel applies, so the comparison
    isolates kernel correctness."""
    hi = jax.lax.Precision.HIGHEST
    rd = lambda a: a.astype(jnp.bfloat16).astype(jnp.float32)

    def cell(xv, w_ih, b, hidden):
        z = jnp.dot(rd(xv), rd(w_ih.T), precision=hi) + b
        i = jax.nn.sigmoid(z[:, 0 * hidden:1 * hidden])
        g = jnp.tanh(z[:, 2 * hidden:3 * hidden])
        o = jax.nn.sigmoid(z[:, 3 * hidden:4 * hidden])
        return o * jnp.tanh(i * g)

    h1 = cell(x, params["w_ih1"], params["b1"], H1)
    h2 = cell(h1, params["w_ih2"], params["b2"], H2)
    h3 = cell(h2, params["w_ih3"], params["b3"], H3)
    logits = jnp.dot(rd(h3), rd(params["w_fc"].T), precision=hi) + params["b_fc"]
    return logits


if __name__ == "__main__":
    batch_size = 16
    class_num = 16          # input_dim of the classifier

    key = jax.random.PRNGKey(0)
    kx, kp = jax.random.split(key)
    x = jax.random.normal(kx, (batch_size, class_num), jnp.float32)

    params = make_params(kp, class_num)
    prepped = prepare_params(params)          # one-time param prep (hoisted)

    # min_tiles=2 -> grid of 2 batch tiles (tb=8), exercising the pipelined
    # grid path and megacore sharding on v7x.
    y = lstm_classifier_forward(x, prepped, max_tb=2048, min_tiles=2)
    y = jax.block_until_ready(y)

    y_ref = _reference_forward(x, params)
    assert y.shape == (batch_size, OUT)
    assert jnp.allclose(y, y_ref, atol=2e-3, rtol=2e-3), (
        float(jnp.max(jnp.abs(y - y_ref))))

    print("KERNEL_OK")
</pallas_src>

<mosaic_0001>
module attributes {stable_mosaic.version = 11 : i64} {
  func.func @lstm_classifier_kernel(%arg0: i32, %arg1: memref<8x16xf32, #tpu.memory_space<vmem>>, %arg2: memref<16x768xbf16, #tpu.memory_space<vmem>>, %arg3: memref<1x768xf32, #tpu.memory_space<vmem>>, %arg4: memref<256x384xbf16, #tpu.memory_space<vmem>>, %arg5: memref<1x384xf32, #tpu.memory_space<vmem>>, %arg6: memref<128x384xbf16, #tpu.memory_space<vmem>>, %arg7: memref<1x384xf32, #tpu.memory_space<vmem>>, %arg8: memref<128x8xbf16, #tpu.memory_space<vmem>>, %arg9: memref<1x8xf32, #tpu.memory_space<vmem>>, %arg10: memref<8x8xf32, #tpu.memory_space<vmem>>) attributes {dimension_semantics = [#tpu.dimension_semantics<parallel>], iteration_bounds = array<i64: 2>, scalar_prefetch = 0 : i64, scratch_operands = 0 : i64, tpu.core_type = #tpu.core_type<tc>, window_params = [{transform_indices = @transform_0, window_bounds = array<i64: 8, 16>}, {pipeline_mode = #tpu.pipeline_mode<synchronous>, transform_indices = @transform_1, window_bounds = array<i64: 16, 768>}, {pipeline_mode = #tpu.pipeline_mode<synchronous>, transform_indices = @transform_2, window_bounds = array<i64: 1, 768>}, {pipeline_mode = #tpu.pipeline_mode<synchronous>, transform_indices = @transform_3, window_bounds = array<i64: 256, 384>}, {pipeline_mode = #tpu.pipeline_mode<synchronous>, transform_indices = @transform_4, window_bounds = array<i64: 1, 384>}, {pipeline_mode = #tpu.pipeline_mode<synchronous>, transform_indices = @transform_5, window_bounds = array<i64: 128, 384>}, {pipeline_mode = #tpu.pipeline_mode<synchronous>, transform_indices = @transform_6, window_bounds = array<i64: 1, 384>}, {pipeline_mode = #tpu.pipeline_mode<synchronous>, transform_indices = @transform_7, window_bounds = array<i64: 128, 8>}, {pipeline_mode = #tpu.pipeline_mode<synchronous>, transform_indices = @transform_8, window_bounds = array<i64: 1, 8>}, {transform_indices = @transform_9, window_bounds = array<i64: 8, 8>}]} {
    %c0 = arith.constant 0 : index
    %c0_0 = arith.constant 0 : index
    %0 = vector.load %arg1[%c0, %c0_0] : memref<8x16xf32, #tpu.memory_space<vmem>>, vector<8x16xf32>
    %1 = arith.truncf %0 : vector<8x16xf32> to vector<8x16xbf16>
    %c0_1 = arith.constant 0 : index
    %c0_2 = arith.constant 0 : index
    %2 = vector.load %arg2[%c0_1, %c0_2] : memref<16x768xbf16, #tpu.memory_space<vmem>>, vector<16x768xbf16>
    %cst = arith.constant dense<0.000000e+00> : vector<8x768xf32>
    %3 = tpu.matmul %1, %2, %cst {dimension_numbers = #tpu.dot_dimension_numbers<[1], [0], [0], [1], [0, 0, 1, 1], [], []>} : vector<8x16xbf16>, vector<16x768xbf16>, vector<8x768xf32> -> vector<8x768xf32>
    %c0_3 = arith.constant 0 : index
    %c0_4 = arith.constant 0 : index
    %4 = vector.load %arg3[%c0_3, %c0_4] : memref<1x768xf32, #tpu.memory_space<vmem>>, vector<1x768xf32>
    %5 = vector.broadcast %4 : vector<1x768xf32> to vector<8x768xf32>
    %6 = arith.addf %3, %5 : vector<8x768xf32>
    %7 = vector.extract_strided_slice %6 {offsets = [0, 0], sizes = [8, 256], strides = [1, 1]} : vector<8x768xf32> to vector<8x256xf32>
    %8 = vector.extract_strided_slice %6 {offsets = [0, 256], sizes = [8, 256], strides = [1, 1]} : vector<8x768xf32> to vector<8x256xf32>
    %9 = vector.extract_strided_slice %6 {offsets = [0, 512], sizes = [8, 256], strides = [1, 1]} : vector<8x768xf32> to vector<8x256xf32>
    %cst_5 = arith.constant 5.000000e-01 : f32
    %10 = vector.broadcast %cst_5 : f32 to vector<8x256xf32>
    %11 = arith.mulf %10, %7 : vector<8x256xf32>
    %12 = math.tanh %11 : vector<8x256xf32>
    %cst_6 = arith.constant 5.000000e-01 : f32
    %13 = vector.broadcast %cst_6 : f32 to vector<8x256xf32>
    %14 = arith.mulf %13, %12 : vector<8x256xf32>
    %cst_7 = arith.constant 5.000000e-01 : f32
    %15 = vector.broadcast %cst_7 : f32 to vector<8x256xf32>
    %16 = arith.addf %14, %15 : vector<8x256xf32>
    %17 = math.tanh %8 : vector<8x256xf32>
    %cst_8 = arith.constant 5.000000e-01 : f32
    %18 = vector.broadcast %cst_8 : f32 to vector<8x256xf32>
    %19 = arith.mulf %18, %9 : vector<8x256xf32>
    %20 = math.tanh %19 : vector<8x256xf32>
    %cst_9 = arith.constant 5.000000e-01 : f32
    %21 = vector.broadcast %cst_9 : f32 to vector<8x256xf32>
    %22 = arith.mulf %21, %20 : vector<8x256xf32>
    %cst_10 = arith.constant 5.000000e-01 : f32
    %23 = vector.broadcast %cst_10 : f32 to vector<8x256xf32>
    %24 = arith.addf %22, %23 : vector<8x256xf32>
    %25 = arith.mulf %16, %17 : vector<8x256xf32>
    %26 = math.tanh %25 : vector<8x256xf32>
    %27 = arith.mulf %24, %26 : vector<8x256xf32>
    %28 = arith.truncf %27 : vector<8x256xf32> to vector<8x256xbf16>
    %c0_11 = arith.constant 0 : index
    %c0_12 = arith.constant 0 : index
    %29 = vector.load %arg4[%c0_11, %c0_12] : memref<256x384xbf16, #tpu.memory_space<vmem>>, vector<256x384xbf16>
    %cst_13 = arith.constant dense<0.000000e+00> : vector<8x384xf32>
    %30 = tpu.matmul %28, %29, %cst_13 {dimension_numbers = #tpu.dot_dimension_numbers<[1], [0], [0], [1], [0, 0, 1, 1], [], []>} : vector<8x256xbf16>, vector<256x384xbf16>, vector<8x384xf32> -> vector<8x384xf32>
    %c0_14 = arith.constant 0 : index
    %c0_15 = arith.constant 0 : index
    %31 = vector.load %arg5[%c0_14, %c0_15] : memref<1x384xf32, #tpu.memory_space<vmem>>, vector<1x384xf32>
    %32 = vector.broadcast %31 : vector<1x384xf32> to vector<8x384xf32>
    %33 = arith.addf %30, %32 : vector<8x384xf32>
    %34 = vector.extract_strided_slice %33 {offsets = [0, 0], sizes = [8, 128], strides = [1, 1]} : vector<8x384xf32> to vector<8x128xf32>
    %35 = vector.extract_strided_slice %33 {offsets = [0, 128], sizes = [8, 128], strides = [1, 1]} : vector<8x384xf32> to vector<8x128xf32>
    %36 = vector.extract_strided_slice %33 {offsets = [0, 256], sizes = [8, 128], strides = [1, 1]} : vector<8x384xf32> to vector<8x128xf32>
    %cst_16 = arith.constant 5.000000e-01 : f32
    %37 = vector.broadcast %cst_16 : f32 to vector<8x128xf32>
    %38 = arith.mulf %37, %34 : vector<8x128xf32>
    %39 = math.tanh %38 : vector<8x128xf32>
    %cst_17 = arith.constant 5.000000e-01 : f32
    %40 = vector.broadcast %cst_17 : f32 to vector<8x128xf32>
    %41 = arith.mulf %40, %39 : vector<8x128xf32>
    %cst_18 = arith.constant 5.000000e-01 : f32
    %42 = vector.broadcast %cst_18 : f32 to vector<8x128xf32>
    %43 = arith.addf %41, %42 : vector<8x128xf32>
    %44 = math.tanh %35 : vector<8x128xf32>
    %cst_19 = arith.constant 5.000000e-01 : f32
    %45 = vector.broadcast %cst_19 : f32 to vector<8x128xf32>
    %46 = arith.mulf %45, %36 : vector<8x128xf32>
    %47 = math.tanh %46 : vector<8x128xf32>
    %cst_20 = arith.constant 5.000000e-01 : f32
    %48 = vector.broadcast %cst_20 : f32 to vector<8x128xf32>
    %49 = arith.mulf %48, %47 : vector<8x128xf32>
    %cst_21 = arith.constant 5.000000e-01 : f32
    %50 = vector.broadcast %cst_21 : f32 to vector<8x128xf32>
    %51 = arith.addf %49, %50 : vector<8x128xf32>
    %52 = arith.mulf %43, %44 : vector<8x128xf32>
    %53 = math.tanh %52 : vector<8x128xf32>
    %54 = arith.mulf %51, %53 : vector<8x128xf32>
    %55 = arith.truncf %54 : vector<8x128xf32> to vector<8x128xbf16>
    %c0_22 = arith.constant 0 : index
    %c0_23 = arith.constant 0 : index
    %56 = vector.load %arg6[%c0_22, %c0_23] : memref<128x384xbf16, #tpu.memory_space<vmem>>, vector<128x384xbf16>
    %cst_24 = arith.constant dense<0.000000e+00> : vector<8x384xf32>
    %57 = tpu.matmul %55, %56, %cst_24 {dimension_numbers = #tpu.dot_dimension_numbers<[1], [0], [0], [1], [0, 0, 1, 1], [], []>} : vector<8x128xbf16>, vector<128x384xbf16>, vector<8x384xf32> -> vector<8x384xf32>
    %c0_25 = arith.constant 0 : index
    %c0_26 = arith.constant 0 : index
    %58 = vector.load %arg7[%c0_25, %c0_26] : memref<1x384xf32, #tpu.memory_space<vmem>>, vector<1x384xf32>
    %59 = vector.broadcast %58 : vector<1x384xf32> to vector<8x384xf32>
    %60 = arith.addf %57, %59 : vector<8x384xf32>
    %61 = vector.extract_strided_slice %60 {offsets = [0, 0], sizes = [8, 128], strides = [1, 1]} : vector<8x384xf32> to vector<8x128xf32>
    %62 = vector.extract_strided_slice %60 {offsets = [0, 128], sizes = [8, 128], strides = [1, 1]} : vector<8x384xf32> to vector<8x128xf32>
    %63 = vector.extract_strided_slice %60 {offsets = [0, 256], sizes = [8, 128], strides = [1, 1]} : vector<8x384xf32> to vector<8x128xf32>
    %cst_27 = arith.constant 5.000000e-01 : f32
    %64 = vector.broadcast %cst_27 : f32 to vector<8x128xf32>
    %65 = arith.mulf %64, %61 : vector<8x128xf32>
    %66 = math.tanh %65 : vector<8x128xf32>
    %cst_28 = arith.constant 5.000000e-01 : f32
    %67 = vector.broadcast %cst_28 : f32 to vector<8x128xf32>
    %68 = arith.mulf %67, %66 : vector<8x128xf32>
    %cst_29 = arith.constant 5.000000e-01 : f32
    %69 = vector.broadcast %cst_29 : f32 to vector<8x128xf32>
    %70 = arith.addf %68, %69 : vector<8x128xf32>
    %71 = math.tanh %62 : vector<8x128xf32>
    %cst_30 = arith.constant 5.000000e-01 : f32
    %72 = vector.broadcast %cst_30 : f32 to vector<8x128xf32>
    %73 = arith.mulf %72, %63 : vector<8x128xf32>
    %74 = math.tanh %73 : vector<8x128xf32>
    %cst_31 = arith.constant 5.000000e-01 : f32
    %75 = vector.broadcast %cst_31 : f32 to vector<8x128xf32>
    %76 = arith.mulf %75, %74 : vector<8x128xf32>
    %cst_32 = arith.constant 5.000000e-01 : f32
    %77 = vector.broadcast %cst_32 : f32 to vector<8x128xf32>
    %78 = arith.addf %76, %77 : vector<8x128xf32>
    %79 = arith.mulf %70, %71 : vector<8x128xf32>
    %80 = math.tanh %79 : vector<8x128xf32>
    %81 = arith.mulf %78, %80 : vector<8x128xf32>
    %82 = arith.truncf %81 : vector<8x128xf32> to vector<8x128xbf16>
    %c0_33 = arith.constant 0 : index
    %c0_34 = arith.constant 0 : index
    %83 = vector.load %arg8[%c0_33, %c0_34] : memref<128x8xbf16, #tpu.memory_space<vmem>>, vector<128x8xbf16>
    %cst_35 = arith.constant dense<0.000000e+00> : vector<8x8xf32>
    %84 = tpu.matmul %82, %83, %cst_35 {dimension_numbers = #tpu.dot_dimension_numbers<[1], [0], [0], [1], [0, 0, 1, 1], [], []>} : vector<8x128xbf16>, vector<128x8xbf16>, vector<8x8xf32> -> vector<8x8xf32>
    %c0_36 = arith.constant 0 : index
    %c0_37 = arith.constant 0 : index
    %85 = vector.load %arg9[%c0_36, %c0_37] : memref<1x8xf32, #tpu.memory_space<vmem>>, vector<1x8xf32>
    %86 = vector.broadcast %85 : vector<1x8xf32> to vector<8x8xf32>
    %87 = arith.addf %84, %86 : vector<8x8xf32>
    %c0_38 = arith.constant 0 : index
    %c0_39 = arith.constant 0 : index
    %88 = vector.load %arg10[%c0_38, %c0_39] : memref<8x8xf32, #tpu.memory_space<vmem>>, vector<8x8xf32>
    tpu.vector_store %arg10[%c0_38, %c0_39], %87 {strides = array<i32>} : memref<8x8xf32, #tpu.memory_space<vmem>>, vector<8x8xf32>,
    return
  }
  func.func @transform_0(%arg0: i32) -> (i32, i32) {
    %c0_i32 = arith.constant 0 : i32
    %c0_i32_0 = arith.constant 0 : i32
    return %arg0, %c0_i32 : i32, i32
  }
  func.func @transform_1(%arg0: i32) -> (i32, i32) {
    %c0_i32 = arith.constant 0 : i32
    %c0_i32_0 = arith.constant 0 : i32
    %c0_i32_1 = arith.constant 0 : i32
    return %c0_i32, %c0_i32_0 : i32, i32
  }
  func.func @transform_2(%arg0: i32) -> (i32, i32) {
    %c0_i32 = arith.constant 0 : i32
    %c0_i32_0 = arith.constant 0 : i32
    %c0_i32_1 = arith.constant 0 : i32
    return %c0_i32, %c0_i32_0 : i32, i32
  }
  func.func @transform_3(%arg0: i32) -> (i32, i32) {
    %c0_i32 = arith.constant 0 : i32
    %c0_i32_0 = arith.constant 0 : i32
    %c0_i32_1 = arith.constant 0 : i32
    return %c0_i32, %c0_i32_0 : i32, i32
  }
  func.func @transform_4(%arg0: i32) -> (i32, i32) {
    %c0_i32 = arith.constant 0 : i32
    %c0_i32_0 = arith.constant 0 : i32
    %c0_i32_1 = arith.constant 0 : i32
    return %c0_i32, %c0_i32_0 : i32, i32
  }
  func.func @transform_5(%arg0: i32) -> (i32, i32) {
    %c0_i32 = arith.constant 0 : i32
    %c0_i32_0 = arith.constant 0 : i32
    %c0_i32_1 = arith.constant 0 : i32
    return %c0_i32, %c0_i32_0 : i32, i32
  }
  func.func @transform_6(%arg0: i32) -> (i32, i32) {
    %c0_i32 = arith.constant 0 : i32
    %c0_i32_0 = arith.constant 0 : i32
    %c0_i32_1 = arith.constant 0 : i32
    return %c0_i32, %c0_i32_0 : i32, i32
  }
  func.func @transform_7(%arg0: i32) -> (i32, i32) {
    %c0_i32 = arith.constant 0 : i32
    %c0_i32_0 = arith.constant 0 : i32
    %c0_i32_1 = arith.constant 0 : i32
    return %c0_i32, %c0_i32_0 : i32, i32
  }
  func.func @transform_8(%arg0: i32) -> (i32, i32) {
    %c0_i32 = arith.constant 0 : i32
    %c0_i32_0 = arith.constant 0 : i32
    %c0_i32_1 = arith.constant 0 : i32
    return %c0_i32, %c0_i32_0 : i32, i32
  }
  func.func @transform_9(%arg0: i32) -> (i32, i32) {
    %c0_i32 = arith.constant 0 : i32
    %c0_i32_0 = arith.constant 0 : i32
    return %arg0, %c0_i32 : i32, i32
  }
}

</mosaic_0001>

<llo_original>
// kernel: lstm_classifier_forward.1
$region0: #{lstm_classifier_forward.1}
  #allocation0 [shape = 'u32[]', space=smem, size = 0x4, offset = 0x4, fixed_abs, tag = 'smem constant byte address 0x4 - core index']
  #allocation1 [shape = 'u32[144,128]{1,0:T(1,128)}', space=vmem, size = 0x12000, scoped, tag = 'internal scratch']
  %s0 = inlined_call_operand.vmem [shape: f32[16,16], index: 0, kind: input, shape index: {}]
  %s1 = inlined_call_operand.vmem [shape: bf16[16,768], index: 1, kind: input, shape index: {}]
  %s2 = inlined_call_operand.vmem [shape: f32[1,768], index: 2, kind: input, shape index: {}]
  %s3 = inlined_call_operand.hbm [shape: bf16[256,384], index: 3, kind: input, shape index: {}]
  %s4 = inlined_call_operand.vmem [shape: f32[1,384], index: 4, kind: input, shape index: {}]
  %s5 = inlined_call_operand.hbm [shape: bf16[128,384], index: 5, kind: input, shape index: {}]
  %s6 = inlined_call_operand.vmem [shape: f32[1,384], index: 6, kind: input, shape index: {}]
  %s7 = inlined_call_operand.vmem [shape: bf16[128,8], index: 7, kind: input, shape index: {}]
  %s8 = inlined_call_operand.vmem [shape: f32[1,8], index: 8, kind: input, shape index: {}]
  %s9 = inlined_call_operand.vmem [shape: f32[16,8], index: 9, kind: output, shape index: {}]
  %s10 = sld [smem:[#allocation0]]
  $region77: #{lstm_classifier_forward.1} parent=0
    _
  %s12 = ssub.s32 1, %s10
  %s13 = scalar_select 0, %s12, %s10
  $region1: #{lstm_classifier_forward.1} parent=0
    #allocation2 [shape = 'u8[196608]{0}', space=vmem, size = 0x30000, scoped, tag = 'input window, operand 3, single buffered']
    #allocation3 [shape = 's32[2]{0}', space=sflag, size = 0x8, scoped, tag = 'scoped memory for lstm_classifier_forward.1']
    #allocation4 [shape = 'u8[98304]{0}', space=vmem, size = 0x18000, scoped, tag = 'input window, operand 5, single buffered']
    #allocation5 [shape = 's32[1]{0}', space=sflag, size = 0x4, scoped, tag = 'scoped memory for lstm_classifier_forward.1']
    %14 = vsyncpa [#allocation3], 0
    %15 = vsyncpa [#allocation5], 0
    loop: start=0, step=1, limit=4
    $region2: #{lstm_classifier_forward.1} parent=1 // loop_pre_header
      _
    $region3: #{lstm_classifier_forward.1} parent=1 // loop_header
      %s17 = sphi 0, %s21
      %p18 = scmp.ge.s32.totalorder %s17, 4
      %s27 = sphi 0, %s29
      %s30 = sphi 0, %s27
      %s31 = sphi 0, %s30
      %s47 = sphi 0, %s31
      %s51 = sphi 0, %s51
      %s53 = sphi 0, %s51
      %s54 = sphi 0, %s53
      %s68 = sphi 0, %s54
      %s72 = sphi 0, %s72
      %s74 = sphi 0, %s72
      %s75 = sphi 0, %s74
      %s89 = sphi 0, %s75
      %s93 = sphi 0, %s93
      %s95 = sphi 0, %s93
      %s96 = sphi 0, %s95
      %s110 = sphi 0, %s96
      %s114 = sphi 0, %s114
      %s116 = sphi 0, %s114
      %s117 = sphi 0, %s116
      %s131 = sphi 0, %s117
      %s135 = sphi 0, %s135
      %s137 = sphi 0, %s135
      %s138 = sphi 0, %s137
      %s152 = sphi 0, %s138
      %s156 = sphi 0, %s156
      %s158 = sphi 0, %s156
      %s159 = sphi 0, %s158
      %s173 = sphi 0, %s159
      %s177 = sphi 0, %s177
      %s179 = sphi 0, %s177
      %s180 = sphi 0, %s179
      %s194 = sphi 0, %s180
      %s198 = sphi 0, %s198
      %s200 = sphi 0, %s198
      %s201 = sphi 0, %s200
      %s215 = sphi 0, %s201
      %s221 = sphi 0, %s223
      %s224 = sphi 0, %s221
      %s225 = sphi 0, %s224
      %s241 = sphi 0, %s225
    $region4: #{lstm_classifier_forward.1} parent=1 // loop_header_branch
      %20 = sbr.rel (%p18) target = $region8
    $region5: #{lstm_classifier_forward.1} parent=1 // loop_body
      %s22 = ssub.s32 %s17, 1
      %s23 = ssub.s32 %s17, 2
      %s24 = sadd.s32 %s17, 1
      %s25 = ssub.s32 %s17, %s24
      %p26 = scmp.eq.s32.totalorder %s25, 0
      %s28 = sadd.s32 %s27, 1
      %s29 = scalar_select %p26, %s27, %s28
      %p32 = pneg %p26
      %p33 = scmp.eq.s32.totalorder %s17, 1
      %p34 = por %p32, %p33
      %p35 = scmp.ne.s32.totalorder %s27, %s30
      %p36 = scmp.eq.s32.totalorder %s17, 0
      %p37 = por %p35, %p36
      %p38 = scmp.ne.s32.totalorder %s27, %s30
      %p39 = scmp.eq.s32.totalorder %s22, 1
      %p40 = por %p38, %p39
      %p41 = scmp.ne.s32.totalorder %s30, %s31
      %p42 = scmp.eq.s32.totalorder %s22, 0
      %p43 = por %p41, %p42
      %p44 = scmp.ne.s32.totalorder %s30, %s31
      %p45 = scmp.eq.s32.totalorder %s23, 1
      %p46 = por %p44, %p45
      %p48 = scmp.ne.s32.totalorder %s31, %s47
      %p49 = scmp.eq.s32.totalorder %s23, 0
      %p50 = por %p48, %p49
      %s52 = sadd.s32 %s51, 1
      %p55 = scmp.eq.s32.totalorder %s17, 1
      %p56 = scmp.ne.s32.totalorder %s51, %s53
      %p57 = scmp.eq.s32.totalorder %s17, 0
      %p58 = por %p56, %p57
      %p59 = scmp.ne.s32.totalorder %s51, %s53
      %p60 = scmp.eq.s32.totalorder %s22, 1
      %p61 = por %p59, %p60
      %p62 = scmp.ne.s32.totalorder %s53, %s54
      %p63 = scmp.eq.s32.totalorder %s22, 0
      %p64 = por %p62, %p63
      %p65 = scmp.ne.s32.totalorder %s53, %s54
      %p66 = scmp.eq.s32.totalorder %s23, 1
      %p67 = por %p65, %p66
      %p69 = scmp.ne.s32.totalorder %s54, %s68
      %p70 = scmp.eq.s32.totalorder %s23, 0
      %p71 = por %p69, %p70
      %s73 = sadd.s32 %s72, 1
      %p76 = scmp.eq.s32.totalorder %s17, 1
      %p77 = scmp.ne.s32.totalorder %s72, %s74
      %p78 = scmp.eq.s32.totalorder %s17, 0
      %p79 = por %p77, %p78
      %p80 = scmp.ne.s32.totalorder %s72, %s74
      %p81 = scmp.eq.s32.totalorder %s22, 1
      %p82 = por %p80, %p81
      %p83 = scmp.ne.s32.totalorder %s74, %s75
      %p84 = scmp.eq.s32.totalorder %s22, 0
      %p85 = por %p83, %p84
      %p86 = scmp.ne.s32.totalorder %s74, %s75
      %p87 = scmp.eq.s32.totalorder %s23, 1
      %p88 = por %p86, %p87
      %p90 = scmp.ne.s32.totalorder %s75, %s89
      %p91 = scmp.eq.s32.totalorder %s23, 0
      %p92 = por %p90, %p91
      %s94 = sadd.s32 %s93, 1
      %p97 = scmp.eq.s32.totalorder %s17, 1
      %p98 = scmp.ne.s32.totalorder %s93, %s95
      %p99 = scmp.eq.s32.totalorder %s17, 0
      %p100 = por %p98, %p99
      %p101 = scmp.ne.s32.totalorder %s93, %s95
      %p102 = scmp.eq.s32.totalorder %s22, 1
      %p103 = por %p101, %p102
      %p104 = scmp.ne.s32.totalorder %s95, %s96
      %p105 = scmp.eq.s32.totalorder %s22, 0
      %p106 = por %p104, %p105
      %p107 = scmp.ne.s32.totalorder %s95, %s96
      %p108 = scmp.eq.s32.totalorder %s23, 1
      %p109 = por %p107, %p108
      %p111 = scmp.ne.s32.totalorder %s96, %s110
      %p112 = scmp.eq.s32.totalorder %s23, 0
      %p113 = por %p111, %p112
      %s115 = sadd.s32 %s114, 1
      %p118 = scmp.eq.s32.totalorder %s17, 1
      %p119 = scmp.ne.s32.totalorder %s114, %s116
      %p120 = scmp.eq.s32.totalorder %s17, 0
      %p121 = por %p119, %p120
      %p122 = scmp.ne.s32.totalorder %s114, %s116
      %p123 = scmp.eq.s32.totalorder %s22, 1
      %p124 = por %p122, %p123
      %p125 = scmp.ne.s32.totalorder %s116, %s117
      %p126 = scmp.eq.s32.totalorder %s22, 0
      %p127 = por %p125, %p126
      %p128 = scmp.ne.s32.totalorder %s116, %s117
      %p129 = scmp.eq.s32.totalorder %s23, 1
      %p130 = por %p128, %p129
      %p132 = scmp.ne.s32.totalorder %s117, %s131
      %p133 = scmp.eq.s32.totalorder %s23, 0
      %p134 = por %p132, %p133
      %s136 = sadd.s32 %s135, 1
      %p139 = scmp.eq.s32.totalorder %s17, 1
      %p140 = scmp.ne.s32.totalorder %s135, %s137
      %p141 = scmp.eq.s32.totalorder %s17, 0
      %p142 = por %p140, %p141
      %p143 = scmp.ne.s32.totalorder %s135, %s137
      %p144 = scmp.eq.s32.totalorder %s22, 1
      %p145 = por %p143, %p144
      %p146 = scmp.ne.s32.totalorder %s137, %s138
      %p147 = scmp.eq.s32.totalorder %s22, 0
      %p148 = por %p146, %p147
      %p149 = scmp.ne.s32.totalorder %s137, %s138
      %p150 = scmp.eq.s32.totalorder %s23, 1
      %p151 = por %p149, %p150
      %p153 = scmp.ne.s32.totalorder %s138, %s152
      %p154 = scmp.eq.s32.totalorder %s23, 0
      %p155 = por %p153, %p154
      %s157 = sadd.s32 %s156, 1
      %p160 = scmp.eq.s32.totalorder %s17, 1
      %p161 = scmp.ne.s32.totalorder %s156, %s158
      %p162 = scmp.eq.s32.totalorder %s17, 0
      %p163 = por %p161, %p162
      %p164 = scmp.ne.s32.totalorder %s156, %s158
      %p165 = scmp.eq.s32.totalorder %s22, 1
      %p166 = por %p164, %p165
      %p167 = scmp.ne.s32.totalorder %s158, %s159
      %p168 = scmp.eq.s32.totalorder %s22, 0
      %p169 = por %p167, %p168
      %p170 = scmp.ne.s32.totalorder %s158, %s159
      %p171 = scmp.eq.s32.totalorder %s23, 1
      %p172 = por %p170, %p171
      %p174 = scmp.ne.s32.totalorder %s159, %s173
      %p175 = scmp.eq.s32.totalorder %s23, 0
      %p176 = por %p174, %p175
      %s178 = sadd.s32 %s177, 1
      %p181 = scmp.eq.s32.totalorder %s17, 1
      %p182 = scmp.ne.s32.totalorder %s177, %s179
      %p183 = scmp.eq.s32.totalorder %s17, 0
      %p184 = por %p182, %p183
      %p185 = scmp.ne.s32.totalorder %s177, %s179
      %p186 = scmp.eq.s32.totalorder %s22, 1
      %p187 = por %p185, %p186
      %p188 = scmp.ne.s32.totalorder %s179, %s180
      %p189 = scmp.eq.s32.totalorder %s22, 0
      %p190 = por %p188, %p189
      %p191 = scmp.ne.s32.totalorder %s179, %s180
      %p192 = scmp.eq.s32.totalorder %s23, 1
      %p193 = por %p191, %p192
      %p195 = scmp.ne.s32.totalorder %s180, %s194
      %p196 = scmp.eq.s32.totalorder %s23, 0
      %p197 = por %p195, %p196
      %s199 = sadd.s32 %s198, 1
      %p202 = scmp.eq.s32.totalorder %s17, 1
      %p203 = scmp.ne.s32.totalorder %s198, %s200
      %p204 = scmp.eq.s32.totalorder %s17, 0
      %p205 = por %p203, %p204
      %p206 = scmp.ne.s32.totalorder %s198, %s200
      %p207 = scmp.eq.s32.totalorder %s22, 1
      %p208 = por %p206, %p207
      %p209 = scmp.ne.s32.totalorder %s200, %s201
      %p210 = scmp.eq.s32.totalorder %s22, 0
      %p211 = por %p209, %p210
      %p212 = scmp.ne.s32.totalorder %s200, %s201
      %p213 = scmp.eq.s32.totalorder %s23, 1
      %p214 = por %p212, %p213
      %p216 = scmp.ne.s32.totalorder %s201, %s215
      %p217 = scmp.eq.s32.totalorder %s23, 0
      %p218 = por %p216, %p217
      %s219 = ssub.s32 %s17, %s24
      %p220 = scmp.eq.s32.totalorder %s219, 0
      %s222 = sadd.s32 %s221, 1
      %s223 = scalar_select %p220, %s221, %s222
      %p226 = pneg %p220
      %p227 = scmp.eq.s32.totalorder %s17, 1
      %p228 = por %p226, %p227
      %p229 = scmp.ne.s32.totalorder %s221, %s224
      %p230 = scmp.eq.s32.totalorder %s17, 0
      %p231 = por %p229, %p230
      %p232 = scmp.ne.s32.totalorder %s221, %s224
      %p233 = scmp.eq.s32.totalorder %s22, 1
      %p234 = por %p232, %p233
      %p235 = scmp.ne.s32.totalorder %s224, %s225
      %p236 = scmp.eq.s32.totalorder %s22, 0
      %p237 = por %p235, %p236
      %p238 = scmp.ne.s32.totalorder %s224, %s225
      %p239 = scmp.eq.s32.totalorder %s23, 1
      %p240 = por %p238, %p239
      %p242 = scmp.ne.s32.totalorder %s225, %s241
      %p243 = scmp.eq.s32.totalorder %s23, 0
      %p244 = por %p242, %p243
      %p245 = scmp.le.s32.totalorder 1, %s17
      %p246 = scmp.lt.s32.totalorder %s17, 3
      %p247 = pnand %p245, %p246
      %p248 = pneg %p247
      // Predicated region
      $region9: #{lstm_classifier_forward.1} parent=5 // pred_check
        _
      $region10: #{lstm_classifier_forward.1} parent=5 // pred_check_branch
        %250 = sbr.rel (%p247) target = $region12
      $region11: #{lstm_classifier_forward.1} parent=5 // pred_region
        %s251 = ssub.s32 %s17, 1
        // Predicated region
        $region13: #{lstm_classifier_forward.1} parent=11 // pred_check
          %p252 = pneg %p64
        $region14: #{lstm_classifier_forward.1} parent=11 // pred_check_branch
          %254 = sbr.rel (%p252) target = $region16
        $region15: #{lstm_classifier_forward.1} parent=11 // pred_region
          _
        $region16: #{lstm_classifier_forward.1} parent=11 // pred_fallthru
          _
        // Predicated region
        $region17: #{lstm_classifier_forward.1} parent=11 // pred_check
          %p255 = pneg %p85
        $region18: #{lstm_classifier_forward.1} parent=11 // pred_check_branch
          %257 = sbr.rel (%p255) target = $region20
        $region19: #{lstm_classifier_forward.1} parent=11 // pred_region
          _
        $region20: #{lstm_classifier_forward.1} parent=11 // pred_fallthru
          _
        // Predicated region
        $region21: #{lstm_classifier_forward.1} parent=11 // pred_check
          %p258 = pneg %p106
        $region22: #{lstm_classifier_forward.1} parent=11 // pred_check_branch
          %260 = sbr.rel (%p258) target = $region24
        $region23: #{lstm_classifier_forward.1} parent=11 // pred_region
          %s262 = ssub.s32 6144, 6144
          %263 = vsyncadd [#allocation3], %s262
          %s264 = sshll.u32 [#allocation2], 4
          %s265 = int_to_ptr.vmem [resolvable:$true] %s264
          %270 = dma.hbm_to_vmem [thread:$0]  %s3, 6144, %s265, [#allocation3], 192, 192, 12
        $region24: #{lstm_classifier_forward.1} parent=11 // pred_fallthru
          _
        // Predicated region
        $region25: #{lstm_classifier_forward.1} parent=11 // pred_check
          %p271 = pneg %p127
        $region26: #{lstm_classifier_forward.1} parent=11 // pred_check_branch
          %273 = sbr.rel (%p271) target = $region28
        $region27: #{lstm_classifier_forward.1} parent=11 // pred_region
          _
        $region28: #{lstm_classifier_forward.1} parent=11 // pred_fallthru
          _
        // Predicated region
        $region29: #{lstm_classifier_forward.1} parent=11 // pred_check
          %p274 = pneg %p148
        $region30: #{lstm_classifier_forward.1} parent=11 // pred_check_branch
          %276 = sbr.rel (%p274) target = $region32
        $region31: #{lstm_classifier_forward.1} parent=11 // pred_region
          %s278 = ssub.s32 3072, 3072
          %279 = vsyncadd [#allocation5], %s278
          %s280 = sshll.u32 [#allocation4], 4
          %s281 = int_to_ptr.vmem [resolvable:$true] %s280
          %286 = dma.hbm_to_vmem [thread:$0]  %s5, 3072, %s281, [#allocation5], 192, 192, 12
        $region32: #{lstm_classifier_forward.1} parent=11 // pred_fallthru
          _
        // Predicated region
        $region33: #{lstm_classifier_forward.1} parent=11 // pred_check
          %p287 = pneg %p169
        $region34: #{lstm_classifier_forward.1} parent=11 // pred_check_branch
          %289 = sbr.rel (%p287) target = $region36
        $region35: #{lstm_classifier_forward.1} parent=11 // pred_region
          _
        $region36: #{lstm_classifier_forward.1} parent=11 // pred_fallthru
          _
        // Predicated region
        $region37: #{lstm_classifier_forward.1} parent=11 // pred_check
          %p290 = pneg %p190
        $region38: #{lstm_classifier_forward.1} parent=11 // pred_check_branch
          %292 = sbr.rel (%p290) target = $region40
        $region39: #{lstm_classifier_forward.1} parent=11 // pred_region
          _
        $region40: #{lstm_classifier_forward.1} parent=11 // pred_fallthru
          _
        // Predicated region
        $region41: #{lstm_classifier_forward.1} parent=11 // pred_check
          %p293 = pneg %p211
        $region42: #{lstm_classifier_forward.1} parent=11 // pred_check_branch
          %295 = sbr.rel (%p293) target = $region44
        $region43: #{lstm_classifier_forward.1} parent=11 // pred_region
          _
        $region44: #{lstm_classifier_forward.1} parent=11 // pred_fallthru
          _
      $region12: #{lstm_classifier_forward.1} parent=5 // pred_fallthru
        _
      %p296 = scmp.lt.s32.totalorder %s17, 2
      // Predicated region
      $region45: #{lstm_classifier_forward.1} parent=5 // pred_check
        %p297 = pneg %p296
      $region46: #{lstm_classifier_forward.1} parent=5 // pred_check_branch
        %299 = sbr.rel (%p297) target = $region48
      $region47: #{lstm_classifier_forward.1} parent=5 // pred_region
        // Predicated region
        $region49: #{lstm_classifier_forward.1} parent=47 // pred_check
          %p300 = pneg %p37
        $region50: #{lstm_classifier_forward.1} parent=47 // pred_check_branch
          %302 = sbr.rel (%p300) target = $region52
        $region51: #{lstm_classifier_forward.1} parent=47 // pred_region
          %p303 = scmp.lt.s32.totalorder %s17, 1
          %s304 = scalar_select %p303, %s17, 1
          %s305 = smul.addr %s304, 8
          %s306 = scalar_lea.vmem %s0, %s305
        $region52: #{lstm_classifier_forward.1} parent=47 // pred_fallthru
          _
      $region48: #{lstm_classifier_forward.1} parent=5 // pred_fallthru
        _
      %p307 = scmp.le.s32.totalorder 1, %s17
      %p308 = scmp.lt.s32.totalorder %s17, 3
      %p309 = pnand %p307, %p308
      %p310 = pneg %p309
      // Predicated region
      $region53: #{lstm_classifier_forward.1} parent=5 // pred_check
        _
      $region54: #{lstm_classifier_forward.1} parent=5 // pred_check_branch
        %312 = sbr.rel (%p309) target = $region56
      $region55: #{lstm_classifier_forward.1} parent=5 // pred_region
        %s313 = ssub.s32 %s17, 1
        // Predicated region
        $region57: #{lstm_classifier_forward.1} parent=55 // pred_check
          %p314 = pneg %p106
        $region58: #{lstm_classifier_forward.1} parent=55 // pred_check_branch
          %316 = sbr.rel (%p314) target = $region60
        $region59: #{lstm_classifier_forward.1} parent=55 // pred_region
          %317 = dma.done [#allocation3], 6144
        $region60: #{lstm_classifier_forward.1} parent=55 // pred_fallthru
          _
        // Predicated region
        $region61: #{lstm_classifier_forward.1} parent=55 // pred_check
          %p318 = pneg %p148
        $region62: #{lstm_classifier_forward.1} parent=55 // pred_check_branch
          %320 = sbr.rel (%p318) target = $region64
        $region63: #{lstm_classifier_forward.1} parent=55 // pred_region
          %321 = dma.done [#allocation5], 3072
        $region64: #{lstm_classifier_forward.1} parent=55 // pred_fallthru
          _
        %p322 = scmp.lt.s32.totalorder %s22, 1
        %s323 = scalar_select %p322, %s22, 1
        %s324 = smul.addr %s323, 8
        %s325 = scalar_lea.vmem %s0, %s324
        %p326 = pneg %p43
        %p327 = pneg %p40
        %p328 = pneg %p64
        %p329 = pneg %p61
        %p330 = pneg %p85
        %p331 = pneg %p82
        %p332 = pneg %p106
        %p333 = pneg %p103
        %p334 = pneg %p127
        %p335 = pneg %p124
        %p336 = pneg %p148
        %p337 = pneg %p145
        %p338 = pneg %p169
        %p339 = pneg %p166
        %p340 = pneg %p190
        %p341 = pneg %p187
        %p342 = pneg %p211
        %p343 = pneg %p208
        %p344 = pneg %p237
        %p345 = pneg %p234
        %p346 = scmp.lt.s32.totalorder %s22, 1
        %s347 = scalar_select %p346, %s22, 1
        %s348 = smul.addr %s347, 8
        %s349 = scalar_lea.vmem %s9, %s348
        %p350 = scmp.lt.s32.totalorder %s22, 1
        %s351 = scalar_select %p350, %s22, 1
        %s352 = smul.addr %s351, 8
        %s353 = scalar_lea.vmem %s0, %s352
        %p354 = scmp.lt.s32.totalorder %s22, 1
        %s355 = scalar_select %p354, %s22, 1
        %s356 = smul.addr %s355, 8
        %s357 = scalar_lea.vmem %s9, %s356
        %v359 = vld [vmem:[%s353] sm:$0xff]
        %v360 = vpack.c.bf16 %v359, %v359
        %v361 = vld [vmem:[%s1] sm:$0xff]
        %v362 = vld [vmem:[%s1 + $0x8] sm:$0xff]
        %v363 = vld [vmem:[%s1 + $0x10] sm:$0xff]
        %v364 = vld [vmem:[%s1 + $0x18] sm:$0xff]
        %v365 = vld [vmem:[%s1 + $0x20] sm:$0xff]
        %v366 = vld [vmem:[%s1 + $0x28] sm:$0xff]
        %v367 = vld [vmem:[%s2] sm:$0x3f]
        %v369 = vlaneseq
        %v370 = vshrl.u32 %v369, 7
        %v371 = vsub.s32 0, %v370
        %v372 = vrot.slane %v367, %v371
        %v373 = vlaneseq
        %v374 = vshrl.u32 %v373, 7
        %v375 = vsub.s32 1, %v374
        %v376 = vrot.slane %v367, %v375
        %v377 = vlaneseq
        %v378 = vshrl.u32 %v377, 7
        %v379 = vsub.s32 2, %v378
        %v380 = vrot.slane %v367, %v379
        %v381 = vlaneseq
        %v382 = vshrl.u32 %v381, 7
        %v383 = vsub.s32 3, %v382
        %v384 = vrot.slane %v367, %v383
        %v385 = vlaneseq
        %v386 = vshrl.u32 %v385, 7
        %v387 = vsub.s32 4, %v386
        %v388 = vrot.slane %v367, %v387
        %v389 = vlaneseq
        %v390 = vshrl.u32 %v389, 7
        %v391 = vsub.s32 5, %v390
        %v392 = vrot.slane %v367, %v391
        %v405 = vunpack.c.l.b16 %v361
        %v406 = vunpack.c.h.b16 %v361
        %v407 = vunpack.c.l.b16 %v362
        %v408 = vunpack.c.h.b16 %v362
        %v409 = vunpack.c.l.b16 %v363
        %v410 = vunpack.c.h.b16 %v363
        %v411 = vunpack.c.l.b16 %v364
        %v412 = vunpack.c.h.b16 %v364
        %v413 = vunpack.c.l.b16 %v365
        %v414 = vunpack.c.h.b16 %v365
        %v415 = vunpack.c.l.b16 %v366
        %v416 = vunpack.c.h.b16 %v366
        %v417 = vpack.c.b16 %v411, %v405
        %v418 = vpack.c.b16 %v412, %v406
        %v419 = vpack.c.b16 %v413, %v407
        %v420 = vpack.c.b16 %v414, %v408
        %v421 = vpack.c.b16 %v415, %v409
        %v422 = vpack.c.b16 %v416, %v410
        %vm429 = vcmask 130048
        %v431 = vsel %vm429, %v360, 0
        %433 = vmatprep.subr.bf16.mxu0 %v418
        %434 = vmatpush1.bf16.msra.mxu0 %v417
        %435 = vmatprep.subr.bf16.mxu0 0
        %436 = vmatpush1.bf16.msra.mxu0 0
        %437 = vmatprep.subr.bf16.mxu0 0
        %438 = vmatpush1.bf16.msra.mxu0 0
        %439 = vmatprep.subr.bf16.mxu0 0
        %440 = vmatpush1.bf16.msra.mxu0 0
        %441 = vmatprep.subr.bf16.mxu0 0
        %442 = vmatpush1.bf16.msra.mxu0 0
        %443 = vmatprep.subr.bf16.mxu0 0
        %444 = vmatpush1.bf16.msra.mxu0 0
        %445 = vmatprep.subr.bf16.mxu0 0
        %446 = vmatpush1.bf16.msra.mxu0 0
        %447 = vmatprep.subr.bf16.mxu0 0
        %448 = vmatpush1.bf16.msra.mxu0 0
        %449 = vmatprep.subr.bf16.mxu0 0
        %450 = vmatpush1.bf16.msra.mxu0 0
        %451 = vmatprep.subr.bf16.mxu0 0
        %452 = vmatpush1.bf16.msra.mxu0 0
        %453 = vmatprep.subr.bf16.mxu0 0
        %454 = vmatpush1.bf16.msra.mxu0 0
        %455 = vmatprep.subr.bf16.mxu0 0
        %456 = vmatpush1.bf16.msra.mxu0 0
        %457 = vmatprep.subr.bf16.mxu0 0
        %458 = vmatpush1.bf16.msra.mxu0 0
        %459 = vmatprep.subr.bf16.mxu0 0
        %460 = vmatpush1.bf16.msra.mxu0 0
        %461 = vmatprep.subr.bf16.mxu0 0
        %462 = vmatpush1.bf16.msra.mxu0 0
        %463 = vmatprep.subr.bf16.mxu0 0
        %464 = vmatpush1.bf16.msra.mxu0 0
        %465 = vmatprep.mubr.bf16.mxu0 0
        %466 = vmatmul.mubr.bf16.gmra.mrb[0].mxu0 %v431
        %v467 = vpop.f32.mrb[0].mxu0
        %v468 = vadd.f32 %v372, %v467
        %v469 = vpop.f32.mrb[0].mxu0
        %v470 = vadd.f32 %v376, %v469
        %v471 = vpop.f32.mrb[0].mxu0
        %v472 = vpop.f32.mrb[0].mxu0
        %473 = vdwg.mxu0
        %474 = vmatprep.subr.bf16.mxu0 %v420
        %475 = vmatpush1.bf16.msra.mxu0 %v419
        %476 = vmatprep.subr.bf16.mxu0 0
        %477 = vmatpush1.bf16.msra.mxu0 0
        %478 = vmatprep.subr.bf16.mxu0 0
        %479 = vmatpush1.bf16.msra.mxu0 0
        %480 = vmatprep.subr.bf16.mxu0 0
        %481 = vmatpush1.bf16.msra.mxu0 0
        %482 = vmatprep.subr.bf16.mxu0 0
        %483 = vmatpush1.bf16.msra.mxu0 0
        %484 = vmatprep.subr.bf16.mxu0 0
        %485 = vmatpush1.bf16.msra.mxu0 0
        %486 = vmatprep.subr.bf16.mxu0 0
        %487 = vmatpush1.bf16.msra.mxu0 0
        %488 = vmatprep.subr.bf16.mxu0 0
        %489 = vmatpush1.bf16.msra.mxu0 0
        %490 = vmatprep.subr.bf16.mxu0 0
        %491 = vmatpush1.bf16.msra.mxu0 0
        %492 = vmatprep.subr.bf16.mxu0 0
        %493 = vmatpush1.bf16.msra.mxu0 0
        %494 = vmatprep.subr.bf16.mxu0 0
        %495 = vmatpush1.bf16.msra.mxu0 0
        %496 = vmatprep.subr.bf16.mxu0 0
        %497 = vmatpush1.bf16.msra.mxu0 0
        %498 = vmatprep.subr.bf16.mxu0 0
        %499 = vmatpush1.bf16.msra.mxu0 0
        %500 = vmatprep.subr.bf16.mxu0 0
        %501 = vmatpush1.bf16.msra.mxu0 0
        %502 = vmatprep.subr.bf16.mxu0 0
        %503 = vmatpush1.bf16.msra.mxu0 0
        %504 = vmatprep.subr.bf16.mxu0 0
        %505 = vmatpush1.bf16.msra.mxu0 0
        %506 = vmatprep.mubr.bf16.mxu0 0
        %507 = vmatmul.mubr.bf16.gmra.mrb[0].mxu0 %v431
        %v508 = vpop.f32.mrb[0].mxu0
        %v509 = vadd.f32 %v380, %v508
        %v510 = vpop.f32.mrb[0].mxu0
        %v511 = vadd.f32 %v384, %v510
        %v512 = vpop.f32.mrb[0].mxu0
        %v513 = vpop.f32.mrb[0].mxu0
        %514 = vdwg.mxu0
        %515 = vmatprep.subr.bf16.mxu0 %v422
        %516 = vmatpush1.bf16.msra.mxu0 %v421
        %517 = vmatprep.subr.bf16.mxu0 0
        %518 = vmatpush1.bf16.msra.mxu0 0
        %519 = vmatprep.subr.bf16.mxu0 0
        %520 = vmatpush1.bf16.msra.mxu0 0
        %521 = vmatprep.subr.bf16.mxu0 0
        %522 = vmatpush1.bf16.msra.mxu0 0
        %523 = vmatprep.subr.bf16.mxu0 0
        %524 = vmatpush1.bf16.msra.mxu0 0
        %525 = vmatprep.subr.bf16.mxu0 0
        %526 = vmatpush1.bf16.msra.mxu0 0
        %527 = vmatprep.subr.bf16.mxu0 0
        %528 = vmatpush1.bf16.msra.mxu0 0
        %529 = vmatprep.subr.bf16.mxu0 0
        %530 = vmatpush1.bf16.msra.mxu0 0
        %531 = vmatprep.subr.bf16.mxu0 0
        %532 = vmatpush1.bf16.msra.mxu0 0
        %533 = vmatprep.subr.bf16.mxu0 0
        %534 = vmatpush1.bf16.msra.mxu0 0
        %535 = vmatprep.subr.bf16.mxu0 0
        %536 = vmatpush1.bf16.msra.mxu0 0
        %537 = vmatprep.subr.bf16.mxu0 0
        %538 = vmatpush1.bf16.msra.mxu0 0
        %539 = vmatprep.subr.bf16.mxu0 0
        %540 = vmatpush1.bf16.msra.mxu0 0
        %541 = vmatprep.subr.bf16.mxu0 0
        %542 = vmatpush1.bf16.msra.mxu0 0
        %543 = vmatprep.subr.bf16.mxu0 0
        %544 = vmatpush1.bf16.msra.mxu0 0
        %545 = vmatprep.subr.bf16.mxu0 0
        %546 = vmatpush1.bf16.msra.mxu0 0
        %547 = vmatprep.mubr.bf16.mxu0 0
        %548 = vmatmul.mubr.bf16.gmra.mrb[0].mxu0 %v431
        %v549 = vpop.f32.mrb[0].mxu0
        %v550 = vadd.f32 %v388, %v549
        %v551 = vpop.f32.mrb[0].mxu0
        %v552 = vadd.f32 %v392, %v551
        %v553 = vpop.f32.mrb[0].mxu0
        %v554 = vpop.f32.mrb[0].mxu0
        %555 = vdwg.mxu0
        %v556 = vmul.f32 %v468, 0.5
        %v557 = vmul.f32 %v470, 0.5
        %v558 = vtanh.pop %v556
        %v559 = vtanh.pop %v557
        %v560 = vmul.f32 %v558, 0.5
        %v561 = vmul.f32 %v559, 0.5
        %v562 = vadd.f32 %v560, 0.5
        %v563 = vadd.f32 %v561, 0.5
        %v564 = vtanh.pop %v509
        %v565 = vtanh.pop %v511
        %v566 = vmul.f32 %v550, 0.5
        %v567 = vmul.f32 %v552, 0.5
        %v568 = vtanh.pop %v566
        %v569 = vtanh.pop %v567
        %v570 = vmul.f32 %v568, 0.5
        %v571 = vmul.f32 %v569, 0.5
        %v572 = vadd.f32 %v570, 0.5
        %v573 = vadd.f32 %v571, 0.5
        %v574 = vmul.f32 %v562, %v564
        %v575 = vmul.f32 %v563, %v565
        %v576 = vtanh.pop %v574
        %v577 = vtanh.pop %v575
        %v578 = vmul.f32 %v572, %v576
        %v579 = vmul.f32 %v573, %v577
        %v580 = vpack.c.bf16 %v578, %v578
        %v581 = vpack.c.bf16 %v579, %v579
        %v582 = vld [vmem:[#allocation2] sm:$0xff]
        %v583 = vld [vmem:[#allocation2 + $0x8] sm:$0xf]
        %v584 = vld [vmem:[#allocation2 + $0xc] sm:$0xff]
        %v585 = vld [vmem:[#allocation2 + $0x14] sm:$0xf]
        %v586 = vld [vmem:[#allocation2 + $0x18] sm:$0xff]
        %v587 = vld [vmem:[#allocation2 + $0x20] sm:$0xf]
        %v588 = vld [vmem:[#allocation2 + $0x24] sm:$0xff]
        %v589 = vld [vmem:[#allocation2 + $0x2c] sm:$0xf]
        %v590 = vld [vmem:[#allocation2 + $0x30] sm:$0xff]
        %v591 = vld [vmem:[#allocation2 + $0x38] sm:$0xf]
        %v592 = vld [vmem:[#allocation2 + $0x3c] sm:$0xff]
        %v593 = vld [vmem:[#allocation2 + $0x44] sm:$0xf]
        %v594 = vld [vmem:[#allocation2 + $0x48] sm:$0xff]
        %v595 = vld [vmem:[#allocation2 + $0x50] sm:$0xf]
        %v596 = vld [vmem:[#allocation2 + $0x54] sm:$0xff]
        %v597 = vld [vmem:[#allocation2 + $0x5c] sm:$0xf]
        %v598 = vld [vmem:[#allocation2 + $0x60] sm:$0xff]
        %v599 = vld [vmem:[#allocation2 + $0x68] sm:$0xf]
        %v600 = vld [vmem:[#allocation2 + $0x6c] sm:$0xff]
        %v601 = vld [vmem:[#allocation2 + $0x74] sm:$0xf]
        %v602 = vld [vmem:[#allocation2 + $0x78] sm:$0xff]
        %v603 = vld [vmem:[#allocation2 + $0x80] sm:$0xf]
        %v604 = vld [vmem:[#allocation2 + $0x84] sm:$0xff]
        %v605 = vld [vmem:[#allocation2 + $0x8c] sm:$0xf]
        %v606 = vld [vmem:[#allocation2 + $0x90] sm:$0xff]
        %v607 = vld [vmem:[#allocation2 + $0x98] sm:$0xf]
        %v608 = vld [vmem:[#allocation2 + $0x9c] sm:$0xff]
        %v609 = vld [vmem:[#allocation2 + $0xa4] sm:$0xf]
        %v610 = vld [vmem:[#allocation2 + $0xa8] sm:$0xff]
        %v611 = vld [vmem:[#allocation2 + $0xb0] sm:$0xf]
        %v612 = vld [vmem:[#allocation2 + $0xb4] sm:$0xff]
        %v613 = vld [vmem:[#allocation2 + $0xbc] sm:$0xf]
        %v614 = vld [vmem:[#allocation2 + $0xc0] sm:$0xff]
        %v615 = vld [vmem:[#allocation2 + $0xc8] sm:$0xf]
        %v616 = vld [vmem:[#allocation2 + $0xcc] sm:$0xff]
        %v617 = vld [vmem:[#allocation2 + $0xd4] sm:$0xf]
        %v618 = vld [vmem:[#allocation2 + $0xd8] sm:$0xff]
        %v619 = vld [vmem:[#allocation2 + $0xe0] sm:$0xf]
        %v620 = vld [vmem:[#allocation2 + $0xe4] sm:$0xff]
        %v621 = vld [vmem:[#allocation2 + $0xec] sm:$0xf]
        %v622 = vld [vmem:[#allocation2 + $0xf0] sm:$0xff]
        %v623 = vld [vmem:[#allocation2 + $0xf8] sm:$0xf]
        %v624 = vld [vmem:[#allocation2 + $0xfc] sm:$0xff]
        %v625 = vld [vmem:[#allocation2 + $0x104] sm:$0xf]
        %v626 = vld [vmem:[#allocation2 + $0x108] sm:$0xff]
        %v627 = vld [vmem:[#allocation2 + $0x110] sm:$0xf]
        %v628 = vld [vmem:[#allocation2 + $0x114] sm:$0xff]
        %v629 = vld [vmem:[#allocation2 + $0x11c] sm:$0xf]
        %v630 = vld [vmem:[#allocation2 + $0x120] sm:$0xff]
        %v631 = vld [vmem:[#allocation2 + $0x128] sm:$0xf]
        %v632 = vld [vmem:[#allocation2 + $0x12c] sm:$0xff]
        %v633 = vld [vmem:[#allocation2 + $0x134] sm:$0xf]
        %v634 = vld [vmem:[#allocation2 + $0x138] sm:$0xff]
        %v635 = vld [vmem:[#allocation2 + $0x140] sm:$0xf]
        %v636 = vld [vmem:[#allocation2 + $0x144] sm:$0xff]
        %v637 = vld [vmem:[#allocation2 + $0x14c] sm:$0xf]
        %v638 = vld [vmem:[#allocation2 + $0x150] sm:$0xff]
        %v639 = vld [vmem:[#allocation2 + $0x158] sm:$0xf]
        %v640 = vld [vmem:[#allocation2 + $0x15c] sm:$0xff]
        %v641 = vld [vmem:[#allocation2 + $0x164] sm:$0xf]
        %v642 = vld [vmem:[#allocation2 + $0x168] sm:$0xff]
        %v643 = vld [vmem:[#allocation2 + $0x170] sm:$0xf]
        %v644 = vld [vmem:[#allocation2 + $0x174] sm:$0xff]
        %v645 = vld [vmem:[#allocation2 + $0x17c] sm:$0xf]
        %v646 = vld [vmem:[%s4] sm:$0x7]
        %v648 = vlaneseq
        %v649 = vshrl.u32 %v648, 7
        %v650 = vsub.s32 0, %v649
        %v651 = vrot.slane %v646, %v650
        %v652 = vlaneseq
        %v653 = vshrl.u32 %v652, 7
        %v654 = vsub.s32 1, %v653
        %v655 = vrot.slane %v646, %v654
        %v656 = vlaneseq
        %v657 = vshrl.u32 %v656, 7
        %v658 = vsub.s32 2, %v657
        %v659 = vrot.slane %v646, %v658
        %v727 = vunpack.c.l.b16 %v582
        %v728 = vunpack.c.h.b16 %v582
        %v729 = vunpack.c.l.b16 %v583
        %v730 = vunpack.c.l.b16 %v584
        %v731 = vunpack.c.h.b16 %v584
        %v732 = vunpack.c.l.b16 %v585
        %v733 = vunpack.c.l.b16 %v586
        %v734 = vunpack.c.h.b16 %v586
        %v735 = vunpack.c.l.b16 %v587
        %v736 = vunpack.c.l.b16 %v588
        %v737 = vunpack.c.h.b16 %v588
        %v738 = vunpack.c.l.b16 %v589
        %v739 = vunpack.c.l.b16 %v590
        %v740 = vunpack.c.h.b16 %v590
        %v741 = vunpack.c.l.b16 %v591
        %v742 = vunpack.c.l.b16 %v592
        %v743 = vunpack.c.h.b16 %v592
        %v744 = vunpack.c.l.b16 %v593
        %v745 = vunpack.c.l.b16 %v594
        %v746 = vunpack.c.h.b16 %v594
        %v747 = vunpack.c.l.b16 %v595
        %v748 = vunpack.c.l.b16 %v596
        %v749 = vunpack.c.h.b16 %v596
        %v750 = vunpack.c.l.b16 %v597
        %v751 = vunpack.c.l.b16 %v598
        %v752 = vunpack.c.h.b16 %v598
        %v753 = vunpack.c.l.b16 %v599
        %v754 = vunpack.c.l.b16 %v600
        %v755 = vunpack.c.h.b16 %v600
        %v756 = vunpack.c.l.b16 %v601
        %v757 = vunpack.c.l.b16 %v602
        %v758 = vunpack.c.h.b16 %v602
        %v759 = vunpack.c.l.b16 %v603
        %v760 = vunpack.c.l.b16 %v604
        %v761 = vunpack.c.h.b16 %v604
        %v762 = vunpack.c.l.b16 %v605
        %v763 = vunpack.c.l.b16 %v606
        %v764 = vunpack.c.h.b16 %v606
        %v765 = vunpack.c.l.b16 %v607
        %v766 = vunpack.c.l.b16 %v608
        %v767 = vunpack.c.h.b16 %v608
        %v768 = vunpack.c.l.b16 %v609
        %v769 = vunpack.c.l.b16 %v610
        %v770 = vunpack.c.h.b16 %v610
        %v771 = vunpack.c.l.b16 %v611
        %v772 = vunpack.c.l.b16 %v612
        %v773 = vunpack.c.h.b16 %v612
        %v774 = vunpack.c.l.b16 %v613
        %v775 = vunpack.c.l.b16 %v614
        %v776 = vunpack.c.h.b16 %v614
        %v777 = vunpack.c.l.b16 %v615
        %v778 = vunpack.c.l.b16 %v616
        %v779 = vunpack.c.h.b16 %v616
        %v780 = vunpack.c.l.b16 %v617
        %v781 = vunpack.c.l.b16 %v618
        %v782 = vunpack.c.h.b16 %v618
        %v783 = vunpack.c.l.b16 %v619
        %v784 = vunpack.c.l.b16 %v620
        %v785 = vunpack.c.h.b16 %v620
        %v786 = vunpack.c.l.b16 %v621
        %v787 = vunpack.c.l.b16 %v622
        %v788 = vunpack.c.h.b16 %v622
        %v789 = vunpack.c.l.b16 %v623
        %v790 = vunpack.c.l.b16 %v624
        %v791 = vunpack.c.h.b16 %v624
        %v792 = vunpack.c.l.b16 %v625
        %v793 = vunpack.c.l.b16 %v626
        %v794 = vunpack.c.h.b16 %v626
        %v795 = vunpack.c.l.b16 %v627
        %v796 = vunpack.c.l.b16 %v628
        %v797 = vunpack.c.h.b16 %v628
        %v798 = vunpack.c.l.b16 %v629
        %v799 = vunpack.c.l.b16 %v630
        %v800 = vunpack.c.h.b16 %v630
        %v801 = vunpack.c.l.b16 %v631
        %v802 = vunpack.c.l.b16 %v632
        %v803 = vunpack.c.h.b16 %v632
        %v804 = vunpack.c.l.b16 %v633
        %v805 = vunpack.c.l.b16 %v634
        %v806 = vunpack.c.h.b16 %v634
        %v807 = vunpack.c.l.b16 %v635
        %v808 = vunpack.c.l.b16 %v636
        %v809 = vunpack.c.h.b16 %v636
        %v810 = vunpack.c.l.b16 %v637
        %v811 = vunpack.c.l.b16 %v638
        %v812 = vunpack.c.h.b16 %v638
        %v813 = vunpack.c.l.b16 %v639
        %v814 = vunpack.c.l.b16 %v640
        %v815 = vunpack.c.h.b16 %v640
        %v816 = vunpack.c.l.b16 %v641
        %v817 = vunpack.c.l.b16 %v642
        %v818 = vunpack.c.h.b16 %v642
        %v819 = vunpack.c.l.b16 %v643
        %v820 = vunpack.c.l.b16 %v644
        %v821 = vunpack.c.h.b16 %v644
        %v822 = vunpack.c.l.b16 %v645
        %v823 = vpack.c.b16 %v730, %v727
        %v824 = vpack.c.b16 %v731, %v728
        %v825 = vpack.c.b16 %v732, %v729
        %v826 = vpack.c.b16 %v736, %v733
        %v827 = vpack.c.b16 %v737, %v734
        %v828 = vpack.c.b16 %v738, %v735
        %v829 = vpack.c.b16 %v742, %v739
        %v830 = vpack.c.b16 %v743, %v740
        %v831 = vpack.c.b16 %v744, %v741
        %v832 = vpack.c.b16 %v748, %v745
        %v833 = vpack.c.b16 %v749, %v746
        %v834 = vpack.c.b16 %v750, %v747
        %v835 = vpack.c.b16 %v754, %v751
        %v836 = vpack.c.b16 %v755, %v752
        %v837 = vpack.c.b16 %v756, %v753
        %v838 = vpack.c.b16 %v760, %v757
        %v839 = vpack.c.b16 %v761, %v758
        %v840 = vpack.c.b16 %v762, %v759
        %v841 = vpack.c.b16 %v766, %v763
        %v842 = vpack.c.b16 %v767, %v764
        %v843 = vpack.c.b16 %v768, %v765
        %v844 = vpack.c.b16 %v772, %v769
        %v845 = vpack.c.b16 %v773, %v770
        %v846 = vpack.c.b16 %v774, %v771
        %v847 = vpack.c.b16 %v778, %v775
        %v848 = vpack.c.b16 %v779, %v776
        %v849 = vpack.c.b16 %v780, %v777
        %v850 = vpack.c.b16 %v784, %v781
        %v851 = vpack.c.b16 %v785, %v782
        %v852 = vpack.c.b16 %v786, %v783
        %v853 = vpack.c.b16 %v790, %v787
        %v854 = vpack.c.b16 %v791, %v788
        %v855 = vpack.c.b16 %v792, %v789
        %v856 = vpack.c.b16 %v796, %v793
        %v857 = vpack.c.b16 %v797, %v794
        %v858 = vpack.c.b16 %v798, %v795
        %v859 = vpack.c.b16 %v802, %v799
        %v860 = vpack.c.b16 %v803, %v800
        %v861 = vpack.c.b16 %v804, %v801
        %v862 = vpack.c.b16 %v808, %v805
        %v863 = vpack.c.b16 %v809, %v806
        %v864 = vpack.c.b16 %v810, %v807
        %v865 = vpack.c.b16 %v814, %v811
        %v866 = vpack.c.b16 %v815, %v812
        %v867 = vpack.c.b16 %v816, %v813
        %v868 = vpack.c.b16 %v820, %v817
        %v869 = vpack.c.b16 %v821, %v818
        %v870 = vpack.c.b16 %v822, %v819
        %919 = vmatprep.subr.bf16.mxu0 %v824
        %920 = vmatpush1.bf16.msra.mxu0 %v823
        %921 = vmatprep.subr.bf16.mxu0 %v827
        %922 = vmatpush1.bf16.msra.mxu0 %v826
        %923 = vmatprep.subr.bf16.mxu0 %v830
        %924 = vmatpush1.bf16.msra.mxu0 %v829
        %925 = vmatprep.subr.bf16.mxu0 %v833
        %926 = vmatpush1.bf16.msra.mxu0 %v832
        %927 = vmatprep.subr.bf16.mxu0 %v836
        %928 = vmatpush1.bf16.msra.mxu0 %v835
        %929 = vmatprep.subr.bf16.mxu0 %v839
        %930 = vmatpush1.bf16.msra.mxu0 %v838
        %931 = vmatprep.subr.bf16.mxu0 %v842
        %932 = vmatpush1.bf16.msra.mxu0 %v841
        %933 = vmatprep.subr.bf16.mxu0 %v845
        %934 = vmatpush1.bf16.msra.mxu0 %v844
        %935 = vmatprep.subr.bf16.mxu0 %v848
        %936 = vmatpush1.bf16.msra.mxu0 %v847
        %937 = vmatprep.subr.bf16.mxu0 %v851
        %938 = vmatpush1.bf16.msra.mxu0 %v850
        %939 = vmatprep.subr.bf16.mxu0 %v854
        %940 = vmatpush1.bf16.msra.mxu0 %v853
        %941 = vmatprep.subr.bf16.mxu0 %v857
        %942 = vmatpush1.bf16.msra.mxu0 %v856
        %943 = vmatprep.subr.bf16.mxu0 %v860
        %944 = vmatpush1.bf16.msra.mxu0 %v859
        %945 = vmatprep.subr.bf16.mxu0 %v863
        %946 = vmatpush1.bf16.msra.mxu0 %v862
        %947 = vmatprep.subr.bf16.mxu0 %v866
        %948 = vmatpush1.bf16.msra.mxu0 %v865
        %949 = vmatprep.subr.bf16.mxu0 %v869
        %950 = vmatpush1.bf16.msra.mxu0 %v868
        %951 = vmatprep.mubr.bf16.mxu0 %v581
        %952 = vmatmul.mubr.bf16.gmra.mrb[0].mxu0 %v580
        %v953 = vpop.f32.mrb[0].mxu0
        %v954 = vadd.f32 %v651, %v953
        %v955 = vpop.f32.mrb[0].mxu0
        %v956 = vadd.f32 %v655, %v955
        %v957 = vpop.f32.mrb[0].mxu0
        %v958 = vpop.f32.mrb[0].mxu0
        %959 = vdwg.mxu0
        %960 = vmatprep.subr.bf16.mxu0 0
        %961 = vmatpush1.bf16.msra.mxu0 %v825
        %962 = vmatprep.subr.bf16.mxu0 0
        %963 = vmatpush1.bf16.msra.mxu0 %v828
        %964 = vmatprep.subr.bf16.mxu0 0
        %965 = vmatpush1.bf16.msra.mxu0 %v831
        %966 = vmatprep.subr.bf16.mxu0 0
        %967 = vmatpush1.bf16.msra.mxu0 %v834
        %968 = vmatprep.subr.bf16.mxu0 0
        %969 = vmatpush1.bf16.msra.mxu0 %v837
        %970 = vmatprep.subr.bf16.mxu0 0
        %971 = vmatpush1.bf16.msra.mxu0 %v840
        %972 = vmatprep.subr.bf16.mxu0 0
        %973 = vmatpush1.bf16.msra.mxu0 %v843
        %974 = vmatprep.subr.bf16.mxu0 0
        %975 = vmatpush1.bf16.msra.mxu0 %v846
        %976 = vmatprep.subr.bf16.mxu0 0
        %977 = vmatpush1.bf16.msra.mxu0 %v849
        %978 = vmatprep.subr.bf16.mxu0 0
        %979 = vmatpush1.bf16.msra.mxu0 %v852
        %980 = vmatprep.subr.bf16.mxu0 0
        %981 = vmatpush1.bf16.msra.mxu0 %v855
        %982 = vmatprep.subr.bf16.mxu0 0
        %983 = vmatpush1.bf16.msra.mxu0 %v858
        %984 = vmatprep.subr.bf16.mxu0 0
        %985 = vmatpush1.bf16.msra.mxu0 %v861
        %986 = vmatprep.subr.bf16.mxu0 0
        %987 = vmatpush1.bf16.msra.mxu0 %v864
        %988 = vmatprep.subr.bf16.mxu0 0
        %989 = vmatpush1.bf16.msra.mxu0 %v867
        %990 = vmatprep.subr.bf16.mxu0 0
        %991 = vmatpush1.bf16.msra.mxu0 %v870
        %992 = vmatprep.mubr.bf16.mxu0 %v581
        %993 = vmatmul.mubr.bf16.gmra.mrb[0].mxu0 %v580
        %v994 = vpop.f32.mrb[0].mxu0
        %v995 = vadd.f32 %v659, %v994
        %v996 = vpop.f32.mrb[0].mxu0
        %v997 = vpop.f32.mrb[0].mxu0
        %v998 = vpop.f32.mrb[0].mxu0
        %999 = vdwg.mxu0
        %v1000 = vmul.f32 %v954, 0.5
        %v1001 = vtanh.pop %v1000
        %v1002 = vmul.f32 %v1001, 0.5
        %v1003 = vadd.f32 %v1002, 0.5
        %v1004 = vtanh.pop %v956
        %v1005 = vmul.f32 %v995, 0.5
        %v1006 = vtanh.pop %v1005
        %v1007 = vmul.f32 %v1006, 0.5
        %v1008 = vadd.f32 %v1007, 0.5
        %v1009 = vmul.f32 %v1003, %v1004
        %v1010 = vtanh.pop %v1009
        %v1011 = vmul.f32 %v1008, %v1010
        %v1012 = vpack.c.bf16 %v1011, %v1011
        %v1013 = vld [vmem:[#allocation4] sm:$0xff]
        %v1014 = vld [vmem:[#allocation4 + $0x8] sm:$0xf]
        %v1015 = vld [vmem:[#allocation4 + $0xc] sm:$0xff]
        %v1016 = vld [vmem:[#allocation4 + $0x14] sm:$0xf]
        %v1017 = vld [vmem:[#allocation4 + $0x18] sm:$0xff]
        %v1018 = vld [vmem:[#allocation4 + $0x20] sm:$0xf]
        %v1019 = vld [vmem:[#allocation4 + $0x24] sm:$0xff]
        %v1020 = vld [vmem:[#allocation4 + $0x2c] sm:$0xf]
        %v1021 = vld [vmem:[#allocation4 + $0x30] sm:$0xff]
        %v1022 = vld [vmem:[#allocation4 + $0x38] sm:$0xf]
        %v1023 = vld [vmem:[#allocation4 + $0x3c] sm:$0xff]
        %v1024 = vld [vmem:[#allocation4 + $0x44] sm:$0xf]
        %v1025 = vld [vmem:[#allocation4 + $0x48] sm:$0xff]
        %v1026 = vld [vmem:[#allocation4 + $0x50] sm:$0xf]
        %v1027 = vld [vmem:[#allocation4 + $0x54] sm:$0xff]
        %v1028 = vld [vmem:[#allocation4 + $0x5c] sm:$0xf]
        %v1029 = vld [vmem:[#allocation4 + $0x60] sm:$0xff]
        %v1030 = vld [vmem:[#allocation4 + $0x68] sm:$0xf]
        %v1031 = vld [vmem:[#allocation4 + $0x6c] sm:$0xff]
        %v1032 = vld [vmem:[#allocation4 + $0x74] sm:$0xf]
        %v1033 = vld [vmem:[#allocation4 + $0x78] sm:$0xff]
        %v1034 = vld [vmem:[#allocation4 + $0x80] sm:$0xf]
        %v1035 = vld [vmem:[#allocation4 + $0x84] sm:$0xff]
        %v1036 = vld [vmem:[#allocation4 + $0x8c] sm:$0xf]
        %v1037 = vld [vmem:[#allocation4 + $0x90] sm:$0xff]
        %v1038 = vld [vmem:[#allocation4 + $0x98] sm:$0xf]
        %v1039 = vld [vmem:[#allocation4 + $0x9c] sm:$0xff]
        %v1040 = vld [vmem:[#allocation4 + $0xa4] sm:$0xf]
        %v1041 = vld [vmem:[#allocation4 + $0xa8] sm:$0xff]
        %v1042 = vld [vmem:[#allocation4 + $0xb0] sm:$0xf]
        %v1043 = vld [vmem:[#allocation4 + $0xb4] sm:$0xff]
        %v1044 = vld [vmem:[#allocation4 + $0xbc] sm:$0xf]
        %v1045 = vld [vmem:[%s6] sm:$0x7]
        %v1047 = vlaneseq
        %v1048 = vshrl.u32 %v1047, 7
        %v1049 = vsub.s32 0, %v1048
        %v1050 = vrot.slane %v1045, %v1049
        %v1051 = vlaneseq
        %v1052 = vshrl.u32 %v1051, 7
        %v1053 = vsub.s32 1, %v1052
        %v1054 = vrot.slane %v1045, %v1053
        %v1055 = vlaneseq
        %v1056 = vshrl.u32 %v1055, 7
        %v1057 = vsub.s32 2, %v1056
        %v1058 = vrot.slane %v1045, %v1057
        %v1094 = vunpack.c.l.b16 %v1013
        %v1095 = vunpack.c.h.b16 %v1013
        %v1096 = vunpack.c.l.b16 %v1014
        %v1097 = vunpack.c.l.b16 %v1015
        %v1098 = vunpack.c.h.b16 %v1015
        %v1099 = vunpack.c.l.b16 %v1016
        %v1100 = vunpack.c.l.b16 %v1017
        %v1101 = vunpack.c.h.b16 %v1017
        %v1102 = vunpack.c.l.b16 %v1018
        %v1103 = vunpack.c.l.b16 %v1019
        %v1104 = vunpack.c.h.b16 %v1019
        %v1105 = vunpack.c.l.b16 %v1020
        %v1106 = vunpack.c.l.b16 %v1021
        %v1107 = vunpack.c.h.b16 %v1021
        %v1108 = vunpack.c.l.b16 %v1022
        %v1109 = vunpack.c.l.b16 %v1023
        %v1110 = vunpack.c.h.b16 %v1023
        %v1111 = vunpack.c.l.b16 %v1024
        %v1112 = vunpack.c.l.b16 %v1025
        %v1113 = vunpack.c.h.b16 %v1025
        %v1114 = vunpack.c.l.b16 %v1026
        %v1115 = vunpack.c.l.b16 %v1027
        %v1116 = vunpack.c.h.b16 %v1027
        %v1117 = vunpack.c.l.b16 %v1028
        %v1118 = vunpack.c.l.b16 %v1029
        %v1119 = vunpack.c.h.b16 %v1029
        %v1120 = vunpack.c.l.b16 %v1030
        %v1121 = vunpack.c.l.b16 %v1031
        %v1122 = vunpack.c.h.b16 %v1031
        %v1123 = vunpack.c.l.b16 %v1032
        %v1124 = vunpack.c.l.b16 %v1033
        %v1125 = vunpack.c.h.b16 %v1033
        %v1126 = vunpack.c.l.b16 %v1034
        %v1127 = vunpack.c.l.b16 %v1035
        %v1128 = vunpack.c.h.b16 %v1035
        %v1129 = vunpack.c.l.b16 %v1036
        %v1130 = vunpack.c.l.b16 %v1037
        %v1131 = vunpack.c.h.b16 %v1037
        %v1132 = vunpack.c.l.b16 %v1038
        %v1133 = vunpack.c.l.b16 %v1039
        %v1134 = vunpack.c.h.b16 %v1039
        %v1135 = vunpack.c.l.b16 %v1040
        %v1136 = vunpack.c.l.b16 %v1041
        %v1137 = vunpack.c.h.b16 %v1041
        %v1138 = vunpack.c.l.b16 %v1042
        %v1139 = vunpack.c.l.b16 %v1043
        %v1140 = vunpack.c.h.b16 %v1043
        %v1141 = vunpack.c.l.b16 %v1044
        %v1142 = vpack.c.b16 %v1097, %v1094
        %v1143 = vpack.c.b16 %v1098, %v1095
        %v1144 = vpack.c.b16 %v1099, %v1096
        %v1145 = vpack.c.b16 %v1103, %v1100
        %v1146 = vpack.c.b16 %v1104, %v1101
        %v1147 = vpack.c.b16 %v1105, %v1102
        %v1148 = vpack.c.b16 %v1109, %v1106
        %v1149 = vpack.c.b16 %v1110, %v1107
        %v1150 = vpack.c.b16 %v1111, %v1108
        %v1151 = vpack.c.b16 %v1115, %v1112
        %v1152 = vpack.c.b16 %v1116, %v1113
        %v1153 = vpack.c.b16 %v1117, %v1114
        %v1154 = vpack.c.b16 %v1121, %v1118
        %v1155 = vpack.c.b16 %v1122, %v1119
        %v1156 = vpack.c.b16 %v1123, %v1120
        %v1157 = vpack.c.b16 %v1127, %v1124
        %v1158 = vpack.c.b16 %v1128, %v1125
        %v1159 = vpack.c.b16 %v1129, %v1126
        %v1160 = vpack.c.b16 %v1133, %v1130
        %v1161 = vpack.c.b16 %v1134, %v1131
        %v1162 = vpack.c.b16 %v1135, %v1132
        %v1163 = vpack.c.b16 %v1139, %v1136
        %v1164 = vpack.c.b16 %v1140, %v1137
        %v1165 = vpack.c.b16 %v1141, %v1138
        %1190 = vmatprep.subr.bf16.mxu0 %v1143
        %1191 = vmatpush1.bf16.msra.mxu0 %v1142
        %1192 = vmatprep.subr.bf16.mxu0 %v1146
        %1193 = vmatpush1.bf16.msra.mxu0 %v1145
        %1194 = vmatprep.subr.bf16.mxu0 %v1149
        %1195 = vmatpush1.bf16.msra.mxu0 %v1148
        %1196 = vmatprep.subr.bf16.mxu0 %v1152
        %1197 = vmatpush1.bf16.msra.mxu0 %v1151
        %1198 = vmatprep.subr.bf16.mxu0 %v1155
        %1199 = vmatpush1.bf16.msra.mxu0 %v1154
        %1200 = vmatprep.subr.bf16.mxu0 %v1158
        %1201 = vmatpush1.bf16.msra.mxu0 %v1157
        %1202 = vmatprep.subr.bf16.mxu0 %v1161
        %1203 = vmatpush1.bf16.msra.mxu0 %v1160
        %1204 = vmatprep.subr.bf16.mxu0 %v1164
        %1205 = vmatpush1.bf16.msra.mxu0 %v1163
        %1206 = vmatprep.subr.bf16.mxu0 0
        %1207 = vmatpush1.bf16.msra.mxu0 0
        %1208 = vmatprep.subr.bf16.mxu0 0
        %1209 = vmatpush1.bf16.msra.mxu0 0
        %1210 = vmatprep.subr.bf16.mxu0 0
        %1211 = vmatpush1.bf16.msra.mxu0 0
        %1212 = vmatprep.subr.bf16.mxu0 0
        %1213 = vmatpush1.bf16.msra.mxu0 0
        %1214 = vmatprep.subr.bf16.mxu0 0
        %1215 = vmatpush1.bf16.msra.mxu0 0
        %1216 = vmatprep.subr.bf16.mxu0 0
        %1217 = vmatpush1.bf16.msra.mxu0 0
        %1218 = vmatprep.subr.bf16.mxu0 0
        %1219 = vmatpush1.bf16.msra.mxu0 0
        %1220 = vmatprep.subr.bf16.mxu0 0
        %1221 = vmatpush1.bf16.msra.mxu0 0
        %1222 = vmatprep.mubr.bf16.mxu0 0
        %1223 = vmatmul.mubr.bf16.gmra.mrb[0].mxu0 %v1012
        %v1224 = vpop.f32.mrb[0].mxu0
        %v1225 = vadd.f32 %v1050, %v1224
        %v1226 = vpop.f32.mrb[0].mxu0
        %v1227 = vadd.f32 %v1054, %v1226
        %v1228 = vpop.f32.mrb[0].mxu0
        %v1229 = vpop.f32.mrb[0].mxu0
        %1230 = vdwg.mxu0
        %1231 = vmatprep.subr.bf16.mxu0 0
        %1232 = vmatpush1.bf16.msra.mxu0 %v1144
        %1233 = vmatprep.subr.bf16.mxu0 0
        %1234 = vmatpush1.bf16.msra.mxu0 %v1147
        %1235 = vmatprep.subr.bf16.mxu0 0
        %1236 = vmatpush1.bf16.msra.mxu0 %v1150
        %1237 = vmatprep.subr.bf16.mxu0 0
        %1238 = vmatpush1.bf16.msra.mxu0 %v1153
        %1239 = vmatprep.subr.bf16.mxu0 0
        %1240 = vmatpush1.bf16.msra.mxu0 %v1156
        %1241 = vmatprep.subr.bf16.mxu0 0
        %1242 = vmatpush1.bf16.msra.mxu0 %v1159
        %1243 = vmatprep.subr.bf16.mxu0 0
        %1244 = vmatpush1.bf16.msra.mxu0 %v1162
        %1245 = vmatprep.subr.bf16.mxu0 0
        %1246 = vmatpush1.bf16.msra.mxu0 %v1165
        %1247 = vmatprep.subr.bf16.mxu0 0
        %1248 = vmatpush1.bf16.msra.mxu0 0
        %1249 = vmatprep.subr.bf16.mxu0 0
        %1250 = vmatpush1.bf16.msra.mxu0 0
        %1251 = vmatprep.subr.bf16.mxu0 0
        %1252 = vmatpush1.bf16.msra.mxu0 0
        %1253 = vmatprep.subr.bf16.mxu0 0
        %1254 = vmatpush1.bf16.msra.mxu0 0
        %1255 = vmatprep.subr.bf16.mxu0 0
        %1256 = vmatpush1.bf16.msra.mxu0 0
        %1257 = vmatprep.subr.bf16.mxu0 0
        %1258 = vmatpush1.bf16.msra.mxu0 0
        %1259 = vmatprep.subr.bf16.mxu0 0
        %1260 = vmatpush1.bf16.msra.mxu0 0
        %1261 = vmatprep.subr.bf16.mxu0 0
        %1262 = vmatpush1.bf16.msra.mxu0 0
        %1263 = vmatprep.mubr.bf16.mxu0 0
        %1264 = vmatmul.mubr.bf16.gmra.mrb[0].mxu0 %v1012
        %v1265 = vpop.f32.mrb[0].mxu0
        %v1266 = vadd.f32 %v1058, %v1265
        %v1267 = vpop.f32.mrb[0].mxu0
        %v1268 = vpop.f32.mrb[0].mxu0
        %v1269 = vpop.f32.mrb[0].mxu0
        %1270 = vdwg.mxu0
        %v1271 = vmul.f32 %v1225, 0.5
        %v1272 = vtanh.pop %v1271
        %v1273 = vmul.f32 %v1272, 0.5
        %v1274 = vadd.f32 %v1273, 0.5
        %v1275 = vtanh.pop %v1227
        %v1276 = vmul.f32 %v1266, 0.5
        %v1277 = vtanh.pop %v1276
        %v1278 = vmul.f32 %v1277, 0.5
        %v1279 = vadd.f32 %v1278, 0.5
        %v1280 = vmul.f32 %v1274, %v1275
        %v1281 = vtanh.pop %v1280
        %v1282 = vmul.f32 %v1279, %v1281
        %v1283 = vpack.c.bf16 %v1282, %v1282
        %v1284 = vld [vmem:[%s7] sm:$0xf]
        %v1285 = vld [vmem:[%s7 + $0x4] sm:$0xf]
        %v1286 = vld [vmem:[%s7 + $0x8] sm:$0xf]
        %v1287 = vld [vmem:[%s7 + $0xc] sm:$0xf]
        %v1288 = vld [vmem:[%s7 + $0x10] sm:$0xf]
        %v1289 = vld [vmem:[%s7 + $0x14] sm:$0xf]
        %v1290 = vld [vmem:[%s7 + $0x18] sm:$0xf]
        %v1291 = vld [vmem:[%s7 + $0x1c] sm:$0xf]
        %v1292 = vld [vmem:[%s7 + $0x20] sm:$0xf]
        %v1293 = vld [vmem:[%s7 + $0x24] sm:$0xf]
        %v1294 = vld [vmem:[%s7 + $0x28] sm:$0xf]
        %v1295 = vld [vmem:[%s7 + $0x2c] sm:$0xf]
        %v1296 = vld [vmem:[%s7 + $0x30] sm:$0xf]
        %v1297 = vld [vmem:[%s7 + $0x34] sm:$0xf]
        %v1298 = vld [vmem:[%s7 + $0x38] sm:$0xf]
        %v1299 = vld [vmem:[%s7 + $0x3c] sm:$0xf]
        %v1300 = vld [vmem:[%s8] sm:$0x1]
        %v1302 = vlaneseq
        %v1303 = vshrl.u32 %v1302, 7
        %v1304 = vsub.s32 0, %v1303
        %v1305 = vrot.slane %v1300, %v1304
        %v1323 = vunpack.c.l.b16 %v1284
        %v1324 = vunpack.c.l.b16 %v1285
        %v1325 = vunpack.c.l.b16 %v1286
        %v1326 = vunpack.c.l.b16 %v1287
        %v1327 = vunpack.c.l.b16 %v1288
        %v1328 = vunpack.c.l.b16 %v1289
        %v1329 = vunpack.c.l.b16 %v1290
        %v1330 = vunpack.c.l.b16 %v1291
        %v1331 = vunpack.c.l.b16 %v1292
        %v1332 = vunpack.c.l.b16 %v1293
        %v1333 = vunpack.c.l.b16 %v1294
        %v1334 = vunpack.c.l.b16 %v1295
        %v1335 = vunpack.c.l.b16 %v1296
        %v1336 = vunpack.c.l.b16 %v1297
        %v1337 = vunpack.c.l.b16 %v1298
        %v1338 = vunpack.c.l.b16 %v1299
        %v1339 = vpack.c.b16 %v1324, %v1323
        %v1340 = vpack.c.b16 %v1326, %v1325
        %v1341 = vpack.c.b16 %v1328, %v1327
        %v1342 = vpack.c.b16 %v1330, %v1329
        %v1343 = vpack.c.b16 %v1332, %v1331
        %v1344 = vpack.c.b16 %v1334, %v1333
        %v1345 = vpack.c.b16 %v1336, %v1335
        %v1346 = vpack.c.b16 %v1338, %v1337
        %1355 = vmatprep.subr.bf16.mxu0 0
        %1356 = vmatpush1.bf16.msra.mxu0 %v1339
        %1357 = vmatprep.subr.bf16.mxu0 0
        %1358 = vmatpush1.bf16.msra.mxu0 %v1340
        %1359 = vmatprep.subr.bf16.mxu0 0
        %1360 = vmatpush1.bf16.msra.mxu0 %v1341
        %1361 = vmatprep.subr.bf16.mxu0 0
        %1362 = vmatpush1.bf16.msra.mxu0 %v1342
        %1363 = vmatprep.subr.bf16.mxu0 0
        %1364 = vmatpush1.bf16.msra.mxu0 %v1343
        %1365 = vmatprep.subr.bf16.mxu0 0
        %1366 = vmatpush1.bf16.msra.mxu0 %v1344
        %1367 = vmatprep.subr.bf16.mxu0 0
        %1368 = vmatpush1.bf16.msra.mxu0 %v1345
        %1369 = vmatprep.subr.bf16.mxu0 0
        %1370 = vmatpush1.bf16.msra.mxu0 %v1346
        %1371 = vmatprep.subr.bf16.mxu0 0
        %1372 = vmatpush1.bf16.msra.mxu0 0
        %1373 = vmatprep.subr.bf16.mxu0 0
        %1374 = vmatpush1.bf16.msra.mxu0 0
        %1375 = vmatprep.subr.bf16.mxu0 0
        %1376 = vmatpush1.bf16.msra.mxu0 0
        %1377 = vmatprep.subr.bf16.mxu0 0
        %1378 = vmatpush1.bf16.msra.mxu0 0
        %1379 = vmatprep.subr.bf16.mxu0 0
        %1380 = vmatpush1.bf16.msra.mxu0 0
        %1381 = vmatprep.subr.bf16.mxu0 0
        %1382 = vmatpush1.bf16.msra.mxu0 0
        %1383 = vmatprep.subr.bf16.mxu0 0
        %1384 = vmatpush1.bf16.msra.mxu0 0
        %1385 = vmatprep.subr.bf16.mxu0 0
        %1386 = vmatpush1.bf16.msra.mxu0 0
        %1387 = vmatprep.mubr.bf16.mxu0 0
        %1388 = vmatmul.mubr.bf16.gmra.mrb[0].mxu0 %v1283
        %v1389 = vpop.f32.mrb[0].mxu0
        %v1390 = vadd.f32 %v1305, %v1389
        %v1391 = vpop.f32.mrb[0].mxu0
        %v1392 = vpop.f32.mrb[0].mxu0
        %v1393 = vpop.f32.mrb[0].mxu0
        %1394 = vdwg.mxu0
        %vm1395 = vcmask 64512
        %1396 = vst.msk [vmem:[%s357] sm:$0xff] %vm1395, %v1390
        %p1397 = scmp.lt.s32.totalorder %s22, 1
        %s1398 = scalar_select %p1397, %s22, 1
        %s1399 = smul.addr %s1398, 8
        %s1400 = scalar_lea.vmem %s9, %s1399
        // Predicated region
        $region65: #{lstm_classifier_forward.1} parent=55 // pred_check
          %p1401 = pneg %p234
        $region66: #{lstm_classifier_forward.1} parent=55 // pred_check_branch
          %1403 = sbr.rel (%p1401) target = $region68
        $region67: #{lstm_classifier_forward.1} parent=55 // pred_region
          _
        $region68: #{lstm_classifier_forward.1} parent=55 // pred_fallthru
          _
      $region56: #{lstm_classifier_forward.1} parent=5 // pred_fallthru
        _
      %p1404 = scmp.le.s32.totalorder 2, %s17
      // Predicated region
      $region69: #{lstm_classifier_forward.1} parent=5 // pred_check
        %p1405 = pneg %p1404
      $region70: #{lstm_classifier_forward.1} parent=5 // pred_check_branch
        %1407 = sbr.rel (%p1405) target = $region72
      $region71: #{lstm_classifier_forward.1} parent=5 // pred_region
        %s1408 = ssub.s32 %s17, 2
        // Predicated region
        $region73: #{lstm_classifier_forward.1} parent=71 // pred_check
          %p1409 = pneg %p240
        $region74: #{lstm_classifier_forward.1} parent=71 // pred_check_branch
          %1411 = sbr.rel (%p1409) target = $region76
        $region75: #{lstm_classifier_forward.1} parent=71 // pred_region
          %p1412 = scmp.lt.s32.totalorder %s23, 1
          %s1413 = scalar_select %p1412, %s23, 1
          %s1414 = smul.addr %s1413, 8
          %s1415 = scalar_lea.vmem %s9, %s1414
        $region76: #{lstm_classifier_forward.1} parent=71 // pred_fallthru
          _
      $region72: #{lstm_classifier_forward.1} parent=5 // pred_fallthru
        _
    $region6: #{lstm_classifier_forward.1} parent=1 // loop_footer
      %s21 = sadd.s32 1, %s17
    $region7: #{lstm_classifier_forward.1} parent=1 // loop_footer_branch
      %16 = sbr.rel target = $region3
    $region8: #{lstm_classifier_forward.1} parent=1 // loop_exit
      _
    %1416 = vsyncpa [#allocation3], 1
    %s1417 = scalar_lea.sflag [#allocation3], 1
    %1418 = vsyncpa %s1417, 1
    %1419 = vsyncpa [#allocation5], 1

</llo_original>
